<compile_context>
chip_gen: v7x
topology: tpu7x:2x2x1
jax: 0.10.0
libtpu: 0.0.40
codegen_flags: <defaults>
</compile_context>

<pallas_src>
import functools

import jax
import jax.numpy as jnp
from jax.experimental import pallas as pl
from jax.experimental.pallas import tpu as pltpu


# ------------------------------ fused kernel ------------------------------

def _svdsr_kernel(x_ref, w1_ref, b1_ref, g1_ref, be1_ref, avg_ref,
                  w2_ref, b2_ref, w3_ref, b3_ref, s2_ref, mask_ref,
                  loss_ref,
                  g_acc, dsr_acc, dm2_acc, dcov_acc, dcov2_acc,
                  *, z_dim, batch):
    """One batch tile of the lane-packed 4-head MLP + loss accumulation.

    Packed lane layout of the head outputs z (last dim = 4*z_dim):
        [ phi | mu | target_phi | target_mu ]
    Weights are block-diagonal so the single matmul per layer evaluates all
    four heads at once (feature_net sees the obs lanes, the other three see
    the next_obs lanes of the concatenated input).
    """
    step = pl.program_id(0)

    @pl.when(step == 0)
    def _():
        g_acc[...] = jnp.zeros_like(g_acc)
        dsr_acc[...] = jnp.zeros_like(dsr_acc)
        dm2_acc[...] = jnp.zeros_like(dm2_acc)
        dcov_acc[...] = jnp.zeros_like(dcov_acc)
        dcov2_acc[...] = jnp.zeros_like(dcov2_acc)

    x = x_ref[...]                                   # (TS, 2*obs_dim)

    # Layer 1 (all 4 heads lane-packed via block-diagonal W1).
    h = jnp.dot(x, w1_ref[...], preferred_element_type=jnp.float32) + b1_ref[...]

    # Grouped LayerNorm (eps=1e-5) via the block-averaging matmul: stays
    # 128-lane dense, no sub-lane reshapes.  Then affine + tanh ("ntanh").
    mean_b = jnp.dot(h, avg_ref[...], preferred_element_type=jnp.float32)
    cent = h - mean_b
    var_b = jnp.dot(cent * cent, avg_ref[...], preferred_element_type=jnp.float32)
    h = cent * jax.lax.rsqrt(var_b + 1e-5)
    h = jnp.tanh(h * g1_ref[...] + be1_ref[...])

    # Layer 2 + relu (block-diagonal W2, 128 lanes).
    h = jnp.maximum(
        jnp.dot(h, w2_ref[...], preferred_element_type=jnp.float32) + b2_ref[...],
        0.0)

    # Layer 3 (block-diagonal W3) -> packed z (TS, 4*z_dim).
    z = jnp.dot(h, w3_ref[...], preferred_element_type=jnp.float32) + b3_ref[...]

    # Grouped L2-normalize on the phi / target_phi groups only.  F.normalize
    # (eps=1e-12 on the norm) == rsqrt(max(||z||^2, 1e-24)).  mu / target_mu
    # lanes get denominator 1 via the mask (their block-sum rows are zero).
    ssq = jnp.dot(z * z, s2_ref[...], preferred_element_type=jnp.float32) + mask_ref[...]
    z = z * jax.lax.rsqrt(jnp.maximum(ssq, 1e-24))

    # Accumulate the (4Z, 4Z) Gram matrix, contracting the batch/tile axis.
    dn = (((0,), (0,)), ((), ()))
    g_acc[...] += jax.lax.dot_general(z, z, dn, preferred_element_type=jnp.float32)

    # Diagonal terms via per-row reductions (still needed: they are 4th order
    # in z, not recoverable from the Gram matrix).
    Z = z_dim
    phi = z[:, 0 * Z:1 * Z]
    mu_ = z[:, 1 * Z:2 * Z]
    tphi = z[:, 2 * Z:3 * Z]
    tmu = z[:, 3 * Z:4 * Z]
    d_sr = jnp.sum(phi * mu_, axis=-1, keepdims=True)     # diag(SR) rows
    d_tsr = jnp.sum(tphi * tmu, axis=-1, keepdims=True)   # diag(tSR) rows
    d_cov = jnp.sum(phi * phi, axis=-1, keepdims=True)    # diag(Cov) rows
    d_m = d_sr - 0.99 * d_tsr
    dsr_acc[...] += jnp.sum(d_sr, keepdims=True)
    dm2_acc[...] += jnp.sum(d_m * d_m, keepdims=True)
    dcov_acc[...] += jnp.sum(d_cov, keepdims=True)
    dcov2_acc[...] += jnp.sum(d_cov * d_cov, keepdims=True)

    @pl.when(step == pl.num_programs(0) - 1)
    def _():
        G = g_acc[...]
        Gpp = G[0 * Z:1 * Z, 0 * Z:1 * Z]   # phi^T phi
        Gmm = G[1 * Z:2 * Z, 1 * Z:2 * Z]   # mu^T mu
        Gpt = G[0 * Z:1 * Z, 2 * Z:3 * Z]   # phi^T tphi
        Gmt = G[1 * Z:2 * Z, 3 * Z:4 * Z]   # mu^T tmu
        Gtt = G[2 * Z:3 * Z, 2 * Z:3 * Z]   # tphi^T tphi
        Gww = G[3 * Z:4 * Z, 3 * Z:4 * Z]   # tmu^T tmu

        # ||SR - 0.99*tSR||_F^2 and ||Cov||_F^2 from Gram inner products.
        frob_m = (jnp.sum(Gpp * Gmm, keepdims=True)
                  - 1.98 * jnp.sum(Gpt * Gmt, keepdims=True)
                  + 0.9801 * jnp.sum(Gtt * Gww, keepdims=True))
        frob_cov = jnp.sum(Gpp * Gpp, keepdims=True)

        inv_s = 1.0 / float(batch)
        inv_off = 1.0 / float(batch * (batch - 1))
        loss = (-2.0 * dsr_acc[...] * inv_s
                + (frob_m - dm2_acc[...]) * inv_off
                + (frob_cov - dcov2_acc[...]) * inv_off
                - 2.0 * dcov_acc[...] * inv_s)
        loss_ref[...] = loss


# ------------------------------ wrapper ------------------------------

def _pick_tile(S):
    for ts in (1024, 512, 256, 128, 64, 32, 16, 8):
        if S % ts == 0:
            return ts
    return S  # single whole-batch tile (last dims then equal the full array)


def _pack_weights(params, obs_dim, H, Z):
    """Build the lane-packed / block-diagonal weights for the fused kernel.

    Net order (lane groups): 0=feature, 1=mu, 2=target_feature, 3=target_mu.
    """
    f32 = jnp.float32
    w1, b1, g1, be1 = params["w1"], params["b1"], params["g1"], params["be1"]
    w2, b2, w3, b3 = params["w2"], params["b2"], params["w3"], params["b3"]

    W1 = jnp.zeros((2 * obs_dim, 4 * H), f32)
    W1 = W1.at[:obs_dim, 0:H].set(w1[0])                       # feature <- obs lanes
    for n in range(1, 4):                                      # others  <- next_obs lanes
        W1 = W1.at[obs_dim:, n * H:(n + 1) * H].set(w1[n])

    W2 = jnp.zeros((4 * H, 4 * H), f32)
    W3 = jnp.zeros((4 * H, 4 * Z), f32)
    for n in range(4):
        W2 = W2.at[n * H:(n + 1) * H, n * H:(n + 1) * H].set(w2[n])
        W3 = W3.at[n * H:(n + 1) * H, n * Z:(n + 1) * Z].set(w3[n])

    def cat_rows(v):  # (4, 1, d) -> (1, 4*d) in net order
        return v.transpose(1, 0, 2).reshape(1, -1)

    b1c, g1c, be1c = cat_rows(b1), cat_rows(g1), cat_rows(be1)
    b2c, b3c = cat_rows(b2), cat_rows(b3)

    # Block-diagonal group-averaging matrix for the fused LayerNorm.
    gid_h = jnp.arange(4 * H) // H
    avg = (gid_h[:, None] == gid_h[None, :]).astype(f32) / float(H)

    # Block-sum matrix for the fused L2 normalize (phi / target_phi groups
    # only) + mask that puts 1.0 in the denominator of the mu / target_mu lanes.
    gid_z = jnp.arange(4 * Z) // Z
    same = (gid_z[:, None] == gid_z[None, :]).astype(f32)
    norm_grp = ((gid_z == 0) | (gid_z == 2)).astype(f32)
    s_l2 = same * norm_grp[:, None] * norm_grp[None, :]
    mask_mt = (1.0 - norm_grp)[None, :]

    return (W1, b1c, g1c, be1c, avg, W2, b2c, W3, b3c, s_l2, mask_mt)


def svdsr_loss_fused(params, obs, next_obs):
    S, obs_dim = obs.shape
    assert S > 1, "off-diagonal mean requires batch size > 1"
    H = params["w1"].shape[2]
    Z = params["w3"].shape[2]

    packed = _pack_weights(params, obs_dim, H, Z)
    x_cat = jnp.concatenate([obs, next_obs], axis=-1)          # (S, 2*obs_dim)

    TS = _pick_tile(S)
    grid = (S // TS,)

    x_spec = pl.BlockSpec((TS, 2 * obs_dim), lambda i: (i, 0))
    # Weights: full-shape blocks with constant index maps -> DMA'd once,
    # resident in VMEM across all grid steps.
    w_specs = [pl.BlockSpec(w.shape, lambda i: (0, 0)) for w in packed]

    kernel = functools.partial(_svdsr_kernel, z_dim=Z, batch=S)

    out = pl.pallas_call(
        kernel,
        out_shape=jax.ShapeDtypeStruct((1, 1), jnp.float32),
        grid_spec=pltpu.PrefetchScalarGridSpec(
            num_scalar_prefetch=0,
            grid=grid,
            in_specs=[x_spec] + w_specs,
            out_specs=pl.BlockSpec((1, 1), lambda i: (0, 0)),
            scratch_shapes=[
                pltpu.VMEM((4 * Z, 4 * Z), jnp.float32),   # Gram accumulator
                pltpu.VMEM((1, 1), jnp.float32),           # sum diag(SR)
                pltpu.VMEM((1, 1), jnp.float32),           # sum diag(M)^2
                pltpu.VMEM((1, 1), jnp.float32),           # sum diag(Cov)
                pltpu.VMEM((1, 1), jnp.float32),           # sum diag(Cov)^2
            ]),
        compiler_params=pltpu.CompilerParams(
            dimension_semantics=("arbitrary",),
            vmem_limit_bytes=32 * 1024 * 1024),
    )(x_cat, *packed)
    return out[0, 0]


# ------------------------------ parameter setup ------------------------------

def _init_mlp(key, obs_dim, hidden_dim, z_dim):
    k1, k2, k3 = jax.random.split(key, 3)

    def lin(k, fan_in, fan_out):
        return (jax.random.normal(k, (fan_in, fan_out), jnp.float32)
                / jnp.sqrt(jnp.float32(fan_in)))

    return dict(
        w1=lin(k1, obs_dim, hidden_dim),
        b1=jnp.zeros((1, hidden_dim), jnp.float32),
        g1=jnp.ones((1, hidden_dim), jnp.float32),    # LayerNorm weight
        be1=jnp.zeros((1, hidden_dim), jnp.float32),  # LayerNorm bias
        w2=lin(k2, hidden_dim, hidden_dim),
        b2=jnp.zeros((1, hidden_dim), jnp.float32),
        w3=lin(k3, hidden_dim, z_dim),
        b3=jnp.zeros((1, z_dim), jnp.float32),
    )


def init_svdsr_params(key, obs_dim, hidden_dim, z_dim):
    """Params stacked along a leading net axis:
       0 = feature_net, 1 = mu_net, 2 = target_feature_net, 3 = target_mu_net."""
    ks = jax.random.split(key, 4)
    nets = [_init_mlp(k, obs_dim, hidden_dim, z_dim) for k in ks]
    return jax.tree.map(lambda *xs: jnp.stack(xs, axis=0), *nets)


# ------------------------------ SVDSR.forward ------------------------------

def svdsr_forward(params, obs, action, next_obs, future_obs):
    del action, future_obs  # matches the PyTorch forward (unused)

    loss = svdsr_loss_fused(params, obs, next_obs)

    # soft_update_params(tau=0.01): pure parameter bookkeeping -> plain JAX.
    # In-place slice update (only targets rewritten) + donated params buffer.
    tau = 0.01

    def soft(p):
        new_target = tau * p[0:2] + (1.0 - tau) * p[2:4]
        return p.at[2:4].set(new_target)

    new_params = jax.tree.map(soft, params)
    return loss, new_params


# ------------------------------ pure-JAX reference ------------------------------

def _mlp_ref(params, n, x, l2):
    h = x @ params["w1"][n] + params["b1"][n]
    mean = h.mean(-1, keepdims=True)
    var = ((h - mean) ** 2).mean(-1, keepdims=True)
    h = (h - mean) / jnp.sqrt(var + 1e-5) * params["g1"][n] + params["be1"][n]
    h = jnp.tanh(h)
    h = jax.nn.relu(h @ params["w2"][n] + params["b2"][n])
    z = h @ params["w3"][n] + params["b3"][n]
    if l2:
        z = z / jnp.maximum(jnp.linalg.norm(z, axis=-1, keepdims=True), 1e-12)
    return z


def _offdiag_sq_mean(a):
    s = a.shape[0]
    d = jnp.diag(a)
    return (jnp.sum(a * a) - jnp.sum(d * d)) / (s * (s - 1))


def svdsr_loss_reference(params, obs, next_obs):
    phi = _mlp_ref(params, 0, obs, True)
    mu = _mlp_ref(params, 1, next_obs, False)
    tphi = _mlp_ref(params, 2, next_obs, True)
    tmu = _mlp_ref(params, 3, next_obs, False)
    SR = phi @ mu.T
    tSR = tphi @ tmu.T
    Cov = phi @ phi.T
    m = SR - 0.99 * tSR
    return (-2.0 * jnp.diag(SR).mean() + _offdiag_sq_mean(m)
            + _offdiag_sq_mean(Cov) - 2.0 * jnp.diag(Cov).mean())


# ------------------------------ main ------------------------------

if __name__ == "__main__":
    S, obs_dim, action_dim, z_dim, hidden_dim = 8, 16, 4, 16, 32

    root = jax.random.PRNGKey(0)
    k_params, k_obs, k_act, k_next, k_fut = jax.random.split(root, 5)

    params = init_svdsr_params(k_params, obs_dim, hidden_dim, z_dim)
    obs = jax.random.normal(k_obs, (S, obs_dim), jnp.float32)
    action = jax.random.normal(k_act, (S, action_dim), jnp.float32)
    next_obs = jax.random.normal(k_next, (S, obs_dim), jnp.float32)
    future_obs = jax.random.normal(k_fut, (S, obs_dim), jnp.float32)

    # Reference (eager) computed before the donated jit call consumes params.
    ref_loss = jax.block_until_ready(svdsr_loss_reference(params, obs, next_obs))

    fwd = jax.jit(svdsr_forward, donate_argnums=(0,))
    loss, new_params = fwd(params, obs, action, next_obs, future_obs)
    jax.block_until_ready((loss, new_params))

    assert jnp.isfinite(loss)
    assert abs(float(loss) - float(ref_loss)) < 1e-3, (float(loss), float(ref_loss))
    print("KERNEL_OK")
</pallas_src>

<mosaic_0001>
module attributes {stable_mosaic.version = 11 : i64} {
  func.func @_svdsr_kernel(%arg0: i32, %arg1: memref<8x32xf32, #tpu.memory_space<vmem>>, %arg2: memref<32x128xf32, #tpu.memory_space<vmem>>, %arg3: memref<1x128xf32, #tpu.memory_space<vmem>>, %arg4: memref<1x128xf32, #tpu.memory_space<vmem>>, %arg5: memref<1x128xf32, #tpu.memory_space<vmem>>, %arg6: memref<128x128xf32, #tpu.memory_space<vmem>>, %arg7: memref<128x128xf32, #tpu.memory_space<vmem>>, %arg8: memref<1x128xf32, #tpu.memory_space<vmem>>, %arg9: memref<128x64xf32, #tpu.memory_space<vmem>>, %arg10: memref<1x64xf32, #tpu.memory_space<vmem>>, %arg11: memref<64x64xf32, #tpu.memory_space<vmem>>, %arg12: memref<1x64xf32, #tpu.memory_space<vmem>>, %arg13: memref<1x1xf32, #tpu.memory_space<vmem>>, %arg14: memref<64x64xf32, #tpu.memory_space<vmem>>, %arg15: memref<1x1xf32, #tpu.memory_space<vmem>>, %arg16: memref<1x1xf32, #tpu.memory_space<vmem>>, %arg17: memref<1x1xf32, #tpu.memory_space<vmem>>, %arg18: memref<1x1xf32, #tpu.memory_space<vmem>>) attributes {dimension_semantics = [#tpu.dimension_semantics<arbitrary>], iteration_bounds = array<i64: 1>, scalar_prefetch = 0 : i64, scratch_operands = 5 : i64, tpu.core_type = #tpu.core_type<tc>, window_params = [{transform_indices = @transform_0, window_bounds = array<i64: 8, 32>}, {pipeline_mode = #tpu.pipeline_mode<synchronous>, transform_indices = @transform_1, window_bounds = array<i64: 32, 128>}, {pipeline_mode = #tpu.pipeline_mode<synchronous>, transform_indices = @transform_2, window_bounds = array<i64: 1, 128>}, {pipeline_mode = #tpu.pipeline_mode<synchronous>, transform_indices = @transform_3, window_bounds = array<i64: 1, 128>}, {pipeline_mode = #tpu.pipeline_mode<synchronous>, transform_indices = @transform_4, window_bounds = array<i64: 1, 128>}, {pipeline_mode = #tpu.pipeline_mode<synchronous>, transform_indices = @transform_5, window_bounds = array<i64: 128, 128>}, {pipeline_mode = #tpu.pipeline_mode<synchronous>, transform_indices = @transform_6, window_bounds = array<i64: 128, 128>}, {pipeline_mode = #tpu.pipeline_mode<synchronous>, transform_indices = @transform_7, window_bounds = array<i64: 1, 128>}, {pipeline_mode = #tpu.pipeline_mode<synchronous>, transform_indices = @transform_8, window_bounds = array<i64: 128, 64>}, {pipeline_mode = #tpu.pipeline_mode<synchronous>, transform_indices = @transform_9, window_bounds = array<i64: 1, 64>}, {pipeline_mode = #tpu.pipeline_mode<synchronous>, transform_indices = @transform_10, window_bounds = array<i64: 64, 64>}, {pipeline_mode = #tpu.pipeline_mode<synchronous>, transform_indices = @transform_11, window_bounds = array<i64: 1, 64>}, {pipeline_mode = #tpu.pipeline_mode<synchronous>, transform_indices = @transform_12, window_bounds = array<i64: 1, 1>}]} {
    %c0_i32 = arith.constant 0 : i32
    %0 = arith.cmpi eq, %arg0, %c0_i32 : i32
    %1 = arith.extui %0 : i1 to i32
    %c0_i32_0 = arith.constant 0 : i32
    %2 = arith.cmpi ne, %1, %c0_i32_0 : i32
    scf.if %2 {
      %cst_65 = arith.constant 0.000000e+00 : f32
      %105 = vector.broadcast %cst_65 : f32 to vector<64x64xf32>
      %c0_66 = arith.constant 0 : index
      %c0_67 = arith.constant 0 : index
      %106 = vector.load %arg14[%c0_66, %c0_67] : memref<64x64xf32, #tpu.memory_space<vmem>>, vector<64x64xf32>
      tpu.vector_store %arg14[%c0_66, %c0_67], %105 {strides = array<i32>} : memref<64x64xf32, #tpu.memory_space<vmem>>, vector<64x64xf32>,
      %cst_68 = arith.constant 0.000000e+00 : f32
      %107 = vector.broadcast %cst_68 : f32 to vector<1x1xf32>
      %c0_69 = arith.constant 0 : index
      %c0_70 = arith.constant 0 : index
      %108 = vector.load %arg15[%c0_69, %c0_70] : memref<1x1xf32, #tpu.memory_space<vmem>>, vector<1x1xf32>
      tpu.vector_store %arg15[%c0_69, %c0_70], %107 {strides = array<i32>} : memref<1x1xf32, #tpu.memory_space<vmem>>, vector<1x1xf32>,
      %cst_71 = arith.constant 0.000000e+00 : f32
      %109 = vector.broadcast %cst_71 : f32 to vector<1x1xf32>
      %c0_72 = arith.constant 0 : index
      %c0_73 = arith.constant 0 : index
      %110 = vector.load %arg16[%c0_72, %c0_73] : memref<1x1xf32, #tpu.memory_space<vmem>>, vector<1x1xf32>
      tpu.vector_store %arg16[%c0_72, %c0_73], %109 {strides = array<i32>} : memref<1x1xf32, #tpu.memory_space<vmem>>, vector<1x1xf32>,
      %cst_74 = arith.constant 0.000000e+00 : f32
      %111 = vector.broadcast %cst_74 : f32 to vector<1x1xf32>
      %c0_75 = arith.constant 0 : index
      %c0_76 = arith.constant 0 : index
      %112 = vector.load %arg17[%c0_75, %c0_76] : memref<1x1xf32, #tpu.memory_space<vmem>>, vector<1x1xf32>
      tpu.vector_store %arg17[%c0_75, %c0_76], %111 {strides = array<i32>} : memref<1x1xf32, #tpu.memory_space<vmem>>, vector<1x1xf32>,
      %cst_77 = arith.constant 0.000000e+00 : f32
      %113 = vector.broadcast %cst_77 : f32 to vector<1x1xf32>
      %c0_78 = arith.constant 0 : index
      %c0_79 = arith.constant 0 : index
      %114 = vector.load %arg18[%c0_78, %c0_79] : memref<1x1xf32, #tpu.memory_space<vmem>>, vector<1x1xf32>
      tpu.vector_store %arg18[%c0_78, %c0_79], %113 {strides = array<i32>} : memref<1x1xf32, #tpu.memory_space<vmem>>, vector<1x1xf32>,
    } else {
    }
    %c0 = arith.constant 0 : index
    %c0_1 = arith.constant 0 : index
    %3 = vector.load %arg1[%c0, %c0_1] : memref<8x32xf32, #tpu.memory_space<vmem>>, vector<8x32xf32>
    %c0_2 = arith.constant 0 : index
    %c0_3 = arith.constant 0 : index
    %4 = vector.load %arg2[%c0_2, %c0_3] : memref<32x128xf32, #tpu.memory_space<vmem>>, vector<32x128xf32>
    %cst = arith.constant dense<0.000000e+00> : vector<8x128xf32>
    %5 = tpu.matmul %3, %4, %cst {dimension_numbers = #tpu.dot_dimension_numbers<[1], [0], [0], [1], [0, 0, 1, 1], [], []>} : vector<8x32xf32>, vector<32x128xf32>, vector<8x128xf32> -> vector<8x128xf32>
    %c0_4 = arith.constant 0 : index
    %c0_5 = arith.constant 0 : index
    %6 = vector.load %arg3[%c0_4, %c0_5] : memref<1x128xf32, #tpu.memory_space<vmem>>, vector<1x128xf32>
    %7 = vector.broadcast %6 : vector<1x128xf32> to vector<8x128xf32>
    %8 = arith.addf %5, %7 : vector<8x128xf32>
    %c0_6 = arith.constant 0 : index
    %c0_7 = arith.constant 0 : index
    %9 = vector.load %arg6[%c0_6, %c0_7] : memref<128x128xf32, #tpu.memory_space<vmem>>, vector<128x128xf32>
    %cst_8 = arith.constant dense<0.000000e+00> : vector<8x128xf32>
    %10 = tpu.matmul %8, %9, %cst_8 {dimension_numbers = #tpu.dot_dimension_numbers<[1], [0], [0], [1], [0, 0, 1, 1], [], []>} : vector<8x128xf32>, vector<128x128xf32>, vector<8x128xf32> -> vector<8x128xf32>
    %11 = arith.subf %8, %10 : vector<8x128xf32>
    %12 = arith.mulf %11, %11 : vector<8x128xf32>
    %c0_9 = arith.constant 0 : index
    %c0_10 = arith.constant 0 : index
    %13 = vector.load %arg6[%c0_9, %c0_10] : memref<128x128xf32, #tpu.memory_space<vmem>>, vector<128x128xf32>
    %cst_11 = arith.constant dense<0.000000e+00> : vector<8x128xf32>
    %14 = tpu.matmul %12, %13, %cst_11 {dimension_numbers = #tpu.dot_dimension_numbers<[1], [0], [0], [1], [0, 0, 1, 1], [], []>} : vector<8x128xf32>, vector<128x128xf32>, vector<8x128xf32> -> vector<8x128xf32>
    %cst_12 = arith.constant 9.99999974E-6 : f32
    %15 = vector.broadcast %cst_12 : f32 to vector<8x128xf32>
    %16 = arith.addf %14, %15 : vector<8x128xf32>
    %17 = math.rsqrt %16 : vector<8x128xf32>
    %18 = arith.mulf %11, %17 : vector<8x128xf32>
    %c0_13 = arith.constant 0 : index
    %c0_14 = arith.constant 0 : index
    %19 = vector.load %arg4[%c0_13, %c0_14] : memref<1x128xf32, #tpu.memory_space<vmem>>, vector<1x128xf32>
    %20 = vector.broadcast %19 : vector<1x128xf32> to vector<8x128xf32>
    %21 = arith.mulf %18, %20 : vector<8x128xf32>
    %c0_15 = arith.constant 0 : index
    %c0_16 = arith.constant 0 : index
    %22 = vector.load %arg5[%c0_15, %c0_16] : memref<1x128xf32, #tpu.memory_space<vmem>>, vector<1x128xf32>
    %23 = vector.broadcast %22 : vector<1x128xf32> to vector<8x128xf32>
    %24 = arith.addf %21, %23 : vector<8x128xf32>
    %25 = math.tanh %24 : vector<8x128xf32>
    %c0_17 = arith.constant 0 : index
    %c0_18 = arith.constant 0 : index
    %26 = vector.load %arg7[%c0_17, %c0_18] : memref<128x128xf32, #tpu.memory_space<vmem>>, vector<128x128xf32>
    %cst_19 = arith.constant dense<0.000000e+00> : vector<8x128xf32>
    %27 = tpu.matmul %25, %26, %cst_19 {dimension_numbers = #tpu.dot_dimension_numbers<[1], [0], [0], [1], [0, 0, 1, 1], [], []>} : vector<8x128xf32>, vector<128x128xf32>, vector<8x128xf32> -> vector<8x128xf32>
    %c0_20 = arith.constant 0 : index
    %c0_21 = arith.constant 0 : index
    %28 = vector.load %arg8[%c0_20, %c0_21] : memref<1x128xf32, #tpu.memory_space<vmem>>, vector<1x128xf32>
    %29 = vector.broadcast %28 : vector<1x128xf32> to vector<8x128xf32>
    %30 = arith.addf %27, %29 : vector<8x128xf32>
    %cst_22 = arith.constant 0.000000e+00 : f32
    %31 = vector.broadcast %cst_22 : f32 to vector<8x128xf32>
    %32 = arith.maximumf %30, %31 : vector<8x128xf32>
    %c0_23 = arith.constant 0 : index
    %c0_24 = arith.constant 0 : index
    %33 = vector.load %arg9[%c0_23, %c0_24] : memref<128x64xf32, #tpu.memory_space<vmem>>, vector<128x64xf32>
    %cst_25 = arith.constant dense<0.000000e+00> : vector<8x64xf32>
    %34 = tpu.matmul %32, %33, %cst_25 {dimension_numbers = #tpu.dot_dimension_numbers<[1], [0], [0], [1], [0, 0, 1, 1], [], []>} : vector<8x128xf32>, vector<128x64xf32>, vector<8x64xf32> -> vector<8x64xf32>
    %c0_26 = arith.constant 0 : index
    %c0_27 = arith.constant 0 : index
    %35 = vector.load %arg10[%c0_26, %c0_27] : memref<1x64xf32, #tpu.memory_space<vmem>>, vector<1x64xf32>
    %36 = vector.broadcast %35 : vector<1x64xf32> to vector<8x64xf32>
    %37 = arith.addf %34, %36 : vector<8x64xf32>
    %38 = arith.mulf %37, %37 : vector<8x64xf32>
    %c0_28 = arith.constant 0 : index
    %c0_29 = arith.constant 0 : index
    %39 = vector.load %arg11[%c0_28, %c0_29] : memref<64x64xf32, #tpu.memory_space<vmem>>, vector<64x64xf32>
    %cst_30 = arith.constant dense<0.000000e+00> : vector<8x64xf32>
    %40 = tpu.matmul %38, %39, %cst_30 {dimension_numbers = #tpu.dot_dimension_numbers<[1], [0], [0], [1], [0, 0, 1, 1], [], []>} : vector<8x64xf32>, vector<64x64xf32>, vector<8x64xf32> -> vector<8x64xf32>
    %c0_31 = arith.constant 0 : index
    %c0_32 = arith.constant 0 : index
    %41 = vector.load %arg12[%c0_31, %c0_32] : memref<1x64xf32, #tpu.memory_space<vmem>>, vector<1x64xf32>
    %42 = vector.broadcast %41 : vector<1x64xf32> to vector<8x64xf32>
    %43 = arith.addf %40, %42 : vector<8x64xf32>
    %cst_33 = arith.constant 1.000000e-24 : f32
    %44 = vector.broadcast %cst_33 : f32 to vector<8x64xf32>
    %45 = arith.maximumf %43, %44 : vector<8x64xf32>
    %46 = math.rsqrt %45 : vector<8x64xf32>
    %47 = arith.mulf %37, %46 : vector<8x64xf32>
    %c0_34 = arith.constant 0 : index
    %c0_35 = arith.constant 0 : index
    %48 = vector.load %arg14[%c0_34, %c0_35] : memref<64x64xf32, #tpu.memory_space<vmem>>, vector<64x64xf32>
    %cst_36 = arith.constant dense<0.000000e+00> : vector<64x64xf32>
    %49 = tpu.matmul %47, %47, %cst_36 {dimension_numbers = #tpu.dot_dimension_numbers<[0], [0], [1], [1], [0, 1, 1, 1], [], []>} : vector<8x64xf32>, vector<8x64xf32>, vector<64x64xf32> -> vector<64x64xf32>
    %50 = arith.addf %48, %49 : vector<64x64xf32>
    %c0_37 = arith.constant 0 : index
    %c0_38 = arith.constant 0 : index
    %51 = vector.load %arg14[%c0_37, %c0_38] : memref<64x64xf32, #tpu.memory_space<vmem>>, vector<64x64xf32>
    tpu.vector_store %arg14[%c0_37, %c0_38], %50 {strides = array<i32>} : memref<64x64xf32, #tpu.memory_space<vmem>>, vector<64x64xf32>,
    %52 = vector.extract_strided_slice %47 {offsets = [0, 0], sizes = [8, 16], strides = [1, 1]} : vector<8x64xf32> to vector<8x16xf32>
    %53 = vector.extract_strided_slice %47 {offsets = [0, 16], sizes = [8, 16], strides = [1, 1]} : vector<8x64xf32> to vector<8x16xf32>
    %54 = vector.extract_strided_slice %47 {offsets = [0, 32], sizes = [8, 16], strides = [1, 1]} : vector<8x64xf32> to vector<8x16xf32>
    %55 = vector.extract_strided_slice %47 {offsets = [0, 48], sizes = [8, 16], strides = [1, 1]} : vector<8x64xf32> to vector<8x16xf32>
    %56 = arith.mulf %52, %53 : vector<8x16xf32>
    %cst_39 = arith.constant dense<0.000000e+00> : vector<8xf32>
    %57 = vector.multi_reduction <add>, %56, %cst_39 [1] : vector<8x16xf32> to vector<8xf32>
    %58 = vector.shape_cast %57 : vector<8xf32> to vector<8x1xf32>
    %59 = arith.mulf %54, %55 : vector<8x16xf32>
    %cst_40 = arith.constant dense<0.000000e+00> : vector<8xf32>
    %60 = vector.multi_reduction <add>, %59, %cst_40 [1] : vector<8x16xf32> to vector<8xf32>
    %61 = vector.shape_cast %60 : vector<8xf32> to vector<8x1xf32>
    %62 = arith.mulf %52, %52 : vector<8x16xf32>
    %cst_41 = arith.constant dense<0.000000e+00> : vector<8xf32>
    %63 = vector.multi_reduction <add>, %62, %cst_41 [1] : vector<8x16xf32> to vector<8xf32>
    %64 = vector.shape_cast %63 : vector<8xf32> to vector<8x1xf32>
    %cst_42 = arith.constant 9.900000e-01 : f32
    %65 = vector.broadcast %cst_42 : f32 to vector<8x1xf32>
    %66 = arith.mulf %65, %61 : vector<8x1xf32>
    %67 = arith.subf %58, %66 : vector<8x1xf32>
    %c0_43 = arith.constant 0 : index
    %c0_44 = arith.constant 0 : index
    %68 = vector.load %arg15[%c0_43, %c0_44] : memref<1x1xf32, #tpu.memory_space<vmem>>, vector<1x1xf32>
    %69 = vector.shape_cast %58 : vector<8x1xf32> to vector<1x8x1xf32>
    %cst_45 = arith.constant dense<0.000000e+00> : vector<1xf32>
    %70 = vector.multi_reduction <add>, %69, %cst_45 [1, 2] : vector<1x8x1xf32> to vector<1xf32>
    %71 = vector.shape_cast %70 : vector<1xf32> to vector<1x1x1xf32>
    %72 = vector.extract %71[0, 0, 0] : f32 from vector<1x1x1xf32>
    %73 = vector.broadcast %72 : f32 to vector<1x1xf32>
    %74 = arith.addf %68, %73 : vector<1x1xf32>
    %c0_46 = arith.constant 0 : index
    %c0_47 = arith.constant 0 : index
    %75 = vector.load %arg15[%c0_46, %c0_47] : memref<1x1xf32, #tpu.memory_space<vmem>>, vector<1x1xf32>
    tpu.vector_store %arg15[%c0_46, %c0_47], %74 {strides = array<i32>} : memref<1x1xf32, #tpu.memory_space<vmem>>, vector<1x1xf32>,
    %c0_48 = arith.constant 0 : index
    %c0_49 = arith.constant 0 : index
    %76 = vector.load %arg16[%c0_48, %c0_49] : memref<1x1xf32, #tpu.memory_space<vmem>>, vector<1x1xf32>
    %77 = arith.mulf %67, %67 : vector<8x1xf32>
    %78 = vector.shape_cast %77 : vector<8x1xf32> to vector<1x8x1xf32>
    %cst_50 = arith.constant dense<0.000000e+00> : vector<1xf32>
    %79 = vector.multi_reduction <add>, %78, %cst_50 [1, 2] : vector<1x8x1xf32> to vector<1xf32>
    %80 = vector.shape_cast %79 : vector<1xf32> to vector<1x1x1xf32>
    %81 = vector.extract %80[0, 0, 0] : f32 from vector<1x1x1xf32>
    %82 = vector.broadcast %81 : f32 to vector<1x1xf32>
    %83 = arith.addf %76, %82 : vector<1x1xf32>
    %c0_51 = arith.constant 0 : index
    %c0_52 = arith.constant 0 : index
    %84 = vector.load %arg16[%c0_51, %c0_52] : memref<1x1xf32, #tpu.memory_space<vmem>>, vector<1x1xf32>
    tpu.vector_store %arg16[%c0_51, %c0_52], %83 {strides = array<i32>} : memref<1x1xf32, #tpu.memory_space<vmem>>, vector<1x1xf32>,
    %c0_53 = arith.constant 0 : index
    %c0_54 = arith.constant 0 : index
    %85 = vector.load %arg17[%c0_53, %c0_54] : memref<1x1xf32, #tpu.memory_space<vmem>>, vector<1x1xf32>
    %86 = vector.shape_cast %64 : vector<8x1xf32> to vector<1x8x1xf32>
    %cst_55 = arith.constant dense<0.000000e+00> : vector<1xf32>
    %87 = vector.multi_reduction <add>, %86, %cst_55 [1, 2] : vector<1x8x1xf32> to vector<1xf32>
    %88 = vector.shape_cast %87 : vector<1xf32> to vector<1x1x1xf32>
    %89 = vector.extract %88[0, 0, 0] : f32 from vector<1x1x1xf32>
    %90 = vector.broadcast %89 : f32 to vector<1x1xf32>
    %91 = arith.addf %85, %90 : vector<1x1xf32>
    %c0_56 = arith.constant 0 : index
    %c0_57 = arith.constant 0 : index
    %92 = vector.load %arg17[%c0_56, %c0_57] : memref<1x1xf32, #tpu.memory_space<vmem>>, vector<1x1xf32>
    tpu.vector_store %arg17[%c0_56, %c0_57], %91 {strides = array<i32>} : memref<1x1xf32, #tpu.memory_space<vmem>>, vector<1x1xf32>,
    %c0_58 = arith.constant 0 : index
    %c0_59 = arith.constant 0 : index
    %93 = vector.load %arg18[%c0_58, %c0_59] : memref<1x1xf32, #tpu.memory_space<vmem>>, vector<1x1xf32>
    %94 = arith.mulf %64, %64 : vector<8x1xf32>
    %95 = vector.shape_cast %94 : vector<8x1xf32> to vector<1x8x1xf32>
    %cst_60 = arith.constant dense<0.000000e+00> : vector<1xf32>
    %96 = vector.multi_reduction <add>, %95, %cst_60 [1, 2] : vector<1x8x1xf32> to vector<1xf32>
    %97 = vector.shape_cast %96 : vector<1xf32> to vector<1x1x1xf32>
    %98 = vector.extract %97[0, 0, 0] : f32 from vector<1x1x1xf32>
    %99 = vector.broadcast %98 : f32 to vector<1x1xf32>
    %100 = arith.addf %93, %99 : vector<1x1xf32>
    %c0_61 = arith.constant 0 : index
    %c0_62 = arith.constant 0 : index
    %101 = vector.load %arg18[%c0_61, %c0_62] : memref<1x1xf32, #tpu.memory_space<vmem>>, vector<1x1xf32>
    tpu.vector_store %arg18[%c0_61, %c0_62], %100 {strides = array<i32>} : memref<1x1xf32, #tpu.memory_space<vmem>>, vector<1x1xf32>,
    %c0_i32_63 = arith.constant 0 : i32
    %102 = arith.cmpi eq, %arg0, %c0_i32_63 : i32
    %103 = arith.extui %102 : i1 to i32
    %c0_i32_64 = arith.constant 0 : i32
    %104 = arith.cmpi ne, %103, %c0_i32_64 : i32
    scf.if %104 {
      %c0_65 = arith.constant 0 : index
      %c0_66 = arith.constant 0 : index
      %105 = vector.load %arg14[%c0_65, %c0_66] : memref<64x64xf32, #tpu.memory_space<vmem>>, vector<64x64xf32>
      %106 = vector.extract_strided_slice %105 {offsets = [0, 0], sizes = [16, 16], strides = [1, 1]} : vector<64x64xf32> to vector<16x16xf32>
      %107 = vector.extract_strided_slice %105 {offsets = [16, 16], sizes = [16, 16], strides = [1, 1]} : vector<64x64xf32> to vector<16x16xf32>
      %108 = vector.extract_strided_slice %105 {offsets = [0, 32], sizes = [16, 16], strides = [1, 1]} : vector<64x64xf32> to vector<16x16xf32>
      %109 = vector.extract_strided_slice %105 {offsets = [16, 48], sizes = [16, 16], strides = [1, 1]} : vector<64x64xf32> to vector<16x16xf32>
      %110 = vector.extract_strided_slice %105 {offsets = [32, 32], sizes = [16, 16], strides = [1, 1]} : vector<64x64xf32> to vector<16x16xf32>
      %111 = vector.extract_strided_slice %105 {offsets = [48, 48], sizes = [16, 16], strides = [1, 1]} : vector<64x64xf32> to vector<16x16xf32>
      %112 = arith.mulf %106, %107 : vector<16x16xf32>
      %113 = vector.shape_cast %112 : vector<16x16xf32> to vector<1x16x16xf32>
      %cst_67 = arith.constant dense<0.000000e+00> : vector<1xf32>
      %114 = vector.multi_reduction <add>, %113, %cst_67 [1, 2] : vector<1x16x16xf32> to vector<1xf32>
      %115 = vector.shape_cast %114 : vector<1xf32> to vector<1x1x1xf32>
      %116 = vector.extract %115[0, 0, 0] : f32 from vector<1x1x1xf32>
      %117 = vector.broadcast %116 : f32 to vector<1x1xf32>
      %118 = arith.mulf %108, %109 : vector<16x16xf32>
      %119 = vector.shape_cast %118 : vector<16x16xf32> to vector<1x16x16xf32>
      %cst_68 = arith.constant dense<0.000000e+00> : vector<1xf32>
      %120 = vector.multi_reduction <add>, %119, %cst_68 [1, 2] : vector<1x16x16xf32> to vector<1xf32>
      %121 = vector.shape_cast %120 : vector<1xf32> to vector<1x1x1xf32>
      %122 = vector.extract %121[0, 0, 0] : f32 from vector<1x1x1xf32>
      %123 = vector.broadcast %122 : f32 to vector<1x1xf32>
      %cst_69 = arith.constant 1.980000e+00 : f32
      %124 = vector.broadcast %cst_69 : f32 to vector<1x1xf32>
      %125 = arith.mulf %124, %123 : vector<1x1xf32>
      %126 = arith.subf %117, %125 : vector<1x1xf32>
      %127 = arith.mulf %110, %111 : vector<16x16xf32>
      %128 = vector.shape_cast %127 : vector<16x16xf32> to vector<1x16x16xf32>
      %cst_70 = arith.constant dense<0.000000e+00> : vector<1xf32>
      %129 = vector.multi_reduction <add>, %128, %cst_70 [1, 2] : vector<1x16x16xf32> to vector<1xf32>
      %130 = vector.shape_cast %129 : vector<1xf32> to vector<1x1x1xf32>
      %131 = vector.extract %130[0, 0, 0] : f32 from vector<1x1x1xf32>
      %132 = vector.broadcast %131 : f32 to vector<1x1xf32>
      %cst_71 = arith.constant 0.980099976 : f32
      %133 = vector.broadcast %cst_71 : f32 to vector<1x1xf32>
      %134 = arith.mulf %133, %132 : vector<1x1xf32>
      %135 = arith.addf %126, %134 : vector<1x1xf32>
      %136 = arith.mulf %106, %106 : vector<16x16xf32>
      %137 = vector.shape_cast %136 : vector<16x16xf32> to vector<1x16x16xf32>
      %cst_72 = arith.constant dense<0.000000e+00> : vector<1xf32>
      %138 = vector.multi_reduction <add>, %137, %cst_72 [1, 2] : vector<1x16x16xf32> to vector<1xf32>
      %139 = vector.shape_cast %138 : vector<1xf32> to vector<1x1x1xf32>
      %140 = vector.extract %139[0, 0, 0] : f32 from vector<1x1x1xf32>
      %141 = vector.broadcast %140 : f32 to vector<1x1xf32>
      %c0_73 = arith.constant 0 : index
      %c0_74 = arith.constant 0 : index
      %142 = vector.load %arg15[%c0_73, %c0_74] : memref<1x1xf32, #tpu.memory_space<vmem>>, vector<1x1xf32>
      %cst_75 = arith.constant -2.000000e+00 : f32
      %143 = vector.broadcast %cst_75 : f32 to vector<1x1xf32>
      %144 = arith.mulf %143, %142 : vector<1x1xf32>
      %cst_76 = arith.constant 1.250000e-01 : f32
      %145 = vector.broadcast %cst_76 : f32 to vector<1x1xf32>
      %146 = arith.mulf %144, %145 : vector<1x1xf32>
      %c0_77 = arith.constant 0 : index
      %c0_78 = arith.constant 0 : index
      %147 = vector.load %arg16[%c0_77, %c0_78] : memref<1x1xf32, #tpu.memory_space<vmem>>, vector<1x1xf32>
      %148 = arith.subf %135, %147 : vector<1x1xf32>
      %cst_79 = arith.constant 0.0178571437 : f32
      %149 = vector.broadcast %cst_79 : f32 to vector<1x1xf32>
      %150 = arith.mulf %148, %149 : vector<1x1xf32>
      %151 = arith.addf %146, %150 : vector<1x1xf32>
      %c0_80 = arith.constant 0 : index
      %c0_81 = arith.constant 0 : index
      %152 = vector.load %arg18[%c0_80, %c0_81] : memref<1x1xf32, #tpu.memory_space<vmem>>, vector<1x1xf32>
      %153 = arith.subf %141, %152 : vector<1x1xf32>
      %cst_82 = arith.constant 0.0178571437 : f32
      %154 = vector.broadcast %cst_82 : f32 to vector<1x1xf32>
      %155 = arith.mulf %153, %154 : vector<1x1xf32>
      %156 = arith.addf %151, %155 : vector<1x1xf32>
      %c0_83 = arith.constant 0 : index
      %c0_84 = arith.constant 0 : index
      %157 = vector.load %arg17[%c0_83, %c0_84] : memref<1x1xf32, #tpu.memory_space<vmem>>, vector<1x1xf32>
      %cst_85 = arith.constant 2.000000e+00 : f32
      %158 = vector.broadcast %cst_85 : f32 to vector<1x1xf32>
      %159 = arith.mulf %158, %157 : vector<1x1xf32>
      %cst_86 = arith.constant 1.250000e-01 : f32
      %160 = vector.broadcast %cst_86 : f32 to vector<1x1xf32>
      %161 = arith.mulf %159, %160 : vector<1x1xf32>
      %162 = arith.subf %156, %161 : vector<1x1xf32>
      %c0_87 = arith.constant 0 : index
      %c0_88 = arith.constant 0 : index
      %163 = vector.load %arg13[%c0_87, %c0_88] : memref<1x1xf32, #tpu.memory_space<vmem>>, vector<1x1xf32>
      tpu.vector_store %arg13[%c0_87, %c0_88], %162 {strides = array<i32>} : memref<1x1xf32, #tpu.memory_space<vmem>>, vector<1x1xf32>,
    } else {
    }
    return
  }
  func.func @transform_0(%arg0: i32) -> (i32, i32) {
    %c0_i32 = arith.constant 0 : i32
    %c0_i32_0 = arith.constant 0 : i32
    return %arg0, %c0_i32 : i32, i32
  }
  func.func @transform_1(%arg0: i32) -> (i32, i32) {
    %c0_i32 = arith.constant 0 : i32
    %c0_i32_0 = arith.constant 0 : i32
    %c0_i32_1 = arith.constant 0 : i32
    return %c0_i32, %c0_i32_0 : i32, i32
  }
  func.func @transform_2(%arg0: i32) -> (i32, i32) {
    %c0_i32 = arith.constant 0 : i32
    %c0_i32_0 = arith.constant 0 : i32
    %c0_i32_1 = arith.constant 0 : i32
    return %c0_i32, %c0_i32_0 : i32, i32
  }
  func.func @transform_3(%arg0: i32) -> (i32, i32) {
    %c0_i32 = arith.constant 0 : i32
    %c0_i32_0 = arith.constant 0 : i32
    %c0_i32_1 = arith.constant 0 : i32
    return %c0_i32, %c0_i32_0 : i32, i32
  }
  func.func @transform_4(%arg0: i32) -> (i32, i32) {
    %c0_i32 = arith.constant 0 : i32
    %c0_i32_0 = arith.constant 0 : i32
    %c0_i32_1 = arith.constant 0 : i32
    return %c0_i32, %c0_i32_0 : i32, i32
  }
  func.func @transform_5(%arg0: i32) -> (i32, i32) {
    %c0_i32 = arith.constant 0 : i32
    %c0_i32_0 = arith.constant 0 : i32
    %c0_i32_1 = arith.constant 0 : i32
    return %c0_i32, %c0_i32_0 : i32, i32
  }
  func.func @transform_6(%arg0: i32) -> (i32, i32) {
    %c0_i32 = arith.constant 0 : i32
    %c0_i32_0 = arith.constant 0 : i32
    %c0_i32_1 = arith.constant 0 : i32
    return %c0_i32, %c0_i32_0 : i32, i32
  }
  func.func @transform_7(%arg0: i32) -> (i32, i32) {
    %c0_i32 = arith.constant 0 : i32
    %c0_i32_0 = arith.constant 0 : i32
    %c0_i32_1 = arith.constant 0 : i32
    return %c0_i32, %c0_i32_0 : i32, i32
  }
  func.func @transform_8(%arg0: i32) -> (i32, i32) {
    %c0_i32 = arith.constant 0 : i32
    %c0_i32_0 = arith.constant 0 : i32
    %c0_i32_1 = arith.constant 0 : i32
    return %c0_i32, %c0_i32_0 : i32, i32
  }
  func.func @transform_9(%arg0: i32) -> (i32, i32) {
    %c0_i32 = arith.constant 0 : i32
    %c0_i32_0 = arith.constant 0 : i32
    %c0_i32_1 = arith.constant 0 : i32
    return %c0_i32, %c0_i32_0 : i32, i32
  }
  func.func @transform_10(%arg0: i32) -> (i32, i32) {
    %c0_i32 = arith.constant 0 : i32
    %c0_i32_0 = arith.constant 0 : i32
    %c0_i32_1 = arith.constant 0 : i32
    return %c0_i32, %c0_i32_0 : i32, i32
  }
  func.func @transform_11(%arg0: i32) -> (i32, i32) {
    %c0_i32 = arith.constant 0 : i32
    %c0_i32_0 = arith.constant 0 : i32
    %c0_i32_1 = arith.constant 0 : i32
    return %c0_i32, %c0_i32_0 : i32, i32
  }
  func.func @transform_12(%arg0: i32) -> (i32, i32) {
    %c0_i32 = arith.constant 0 : i32
    %c0_i32_0 = arith.constant 0 : i32
    %c0_i32_1 = arith.constant 0 : i32
    return %c0_i32, %c0_i32_0 : i32, i32
  }
}

</mosaic_0001>

<llo_original>
// kernel: svdsr_forward.1
$region0: #{svdsr_forward.1}
  #allocation0 [shape = 'u32[]', space=smem, size = 0x4, offset = 0x4, fixed_abs, tag = 'smem constant byte address 0x4 - core index']
  #allocation1 [shape = 'u32[144,128]{1,0:T(1,128)}', space=vmem, size = 0x12000, scoped, tag = 'internal scratch']
  #allocation2 [shape = 'f32[64,64]{1,0:T(8,128)}', space=vmem, size = 0x8000, scoped, tag = 'scratch operand']
  #allocation3 [shape = 'f32[1,1]{1,0:T(1,128)}', space=vmem, size = 0x200, scoped, tag = 'scratch operand']
  #allocation4 [shape = 'f32[1,1]{1,0:T(1,128)}', space=vmem, size = 0x200, scoped, tag = 'scratch operand']
  #allocation5 [shape = 'f32[1,1]{1,0:T(1,128)}', space=vmem, size = 0x200, scoped, tag = 'scratch operand']
  #allocation6 [shape = 'f32[1,1]{1,0:T(1,128)}', space=vmem, size = 0x200, scoped, tag = 'scratch operand']
  %s0 = inlined_call_operand.vmem [shape: f32[8,32], index: 0, kind: input, shape index: {}]
  %s1 = inlined_call_operand.vmem [shape: f32[32,128], index: 1, kind: input, shape index: {}]
  %s2 = inlined_call_operand.vmem [shape: f32[1,128], index: 2, kind: input, shape index: {}]
  %s3 = inlined_call_operand.vmem [shape: f32[1,128], index: 3, kind: input, shape index: {}]
  %s4 = inlined_call_operand.vmem [shape: f32[1,128], index: 4, kind: input, shape index: {}]
  %s5 = inlined_call_operand.vmem [shape: f32[128,128], index: 5, kind: input, shape index: {}]
  %s6 = inlined_call_operand.vmem [shape: f32[128,128], index: 6, kind: input, shape index: {}]
  %s7 = inlined_call_operand.vmem [shape: f32[1,128], index: 7, kind: input, shape index: {}]
  %s8 = inlined_call_operand.vmem [shape: f32[128,64], index: 8, kind: input, shape index: {}]
  %s9 = inlined_call_operand.vmem [shape: f32[1,64], index: 9, kind: input, shape index: {}]
  %s10 = inlined_call_operand.vmem [shape: f32[64,64], index: 10, kind: input, shape index: {}]
  %s11 = inlined_call_operand.vmem [shape: f32[1,64], index: 11, kind: input, shape index: {}]
  %s12 = inlined_call_operand.hbm [shape: f32[1,1], index: 12, kind: output, shape index: {}]
  %s13 = sld [smem:[#allocation0]]
  $region66: #{svdsr_forward.1} parent=0
    _
  %s15 = ssub.s32 1, %s13
  %s16 = scalar_select 0, %s15, %s13
  $region1: #{svdsr_forward.1} parent=0
    #allocation7 [shape = 'u8[512]{0}', space=vmem, size = 0x400, scoped, tag = 'output window, operand 0, single buffered']
    #allocation8 [shape = 's32[1]{0}', space=sflag, size = 0x4, scoped, tag = 'scoped memory for svdsr_forward.1']
    %17 = vsyncpa [#allocation8], 0
    // Predicated region
    $region2: #{svdsr_forward.1} parent=1 // pred_check
      _
    $region3: #{svdsr_forward.1} parent=1 // pred_check_branch
      %19 = sbr.rel (0) target = $region5
    $region4: #{svdsr_forward.1} parent=1 // pred_region
      _
    $region5: #{svdsr_forward.1} parent=1 // pred_fallthru
      _
    // Predicated region
    $region6: #{svdsr_forward.1} parent=1 // pred_check
      _
    $region7: #{svdsr_forward.1} parent=1 // pred_check_branch
      %21 = sbr.rel (0) target = $region9
    $region8: #{svdsr_forward.1} parent=1 // pred_region
      _
    $region9: #{svdsr_forward.1} parent=1 // pred_fallthru
      _
    // Predicated region
    $region10: #{svdsr_forward.1} parent=1 // pred_check
      _
    $region11: #{svdsr_forward.1} parent=1 // pred_check_branch
      %23 = sbr.rel (0) target = $region13
    $region12: #{svdsr_forward.1} parent=1 // pred_region
      _
    $region13: #{svdsr_forward.1} parent=1 // pred_fallthru
      _
    // Predicated region
    $region14: #{svdsr_forward.1} parent=1 // pred_check
      _
    $region15: #{svdsr_forward.1} parent=1 // pred_check_branch
      %25 = sbr.rel (0) target = $region17
    $region16: #{svdsr_forward.1} parent=1 // pred_region
      _
    $region17: #{svdsr_forward.1} parent=1 // pred_fallthru
      _
    // Predicated region
    $region18: #{svdsr_forward.1} parent=1 // pred_check
      _
    $region19: #{svdsr_forward.1} parent=1 // pred_check_branch
      %27 = sbr.rel (0) target = $region21
    $region20: #{svdsr_forward.1} parent=1 // pred_region
      _
    $region21: #{svdsr_forward.1} parent=1 // pred_fallthru
      _
    // Predicated region
    $region22: #{svdsr_forward.1} parent=1 // pred_check
      _
    $region23: #{svdsr_forward.1} parent=1 // pred_check_branch
      %29 = sbr.rel (0) target = $region25
    $region24: #{svdsr_forward.1} parent=1 // pred_region
      _
    $region25: #{svdsr_forward.1} parent=1 // pred_fallthru
      _
    // Predicated region
    $region26: #{svdsr_forward.1} parent=1 // pred_check
      _
    $region27: #{svdsr_forward.1} parent=1 // pred_check_branch
      %31 = sbr.rel (0) target = $region29
    $region28: #{svdsr_forward.1} parent=1 // pred_region
      _
    $region29: #{svdsr_forward.1} parent=1 // pred_fallthru
      _
    // Predicated region
    $region30: #{svdsr_forward.1} parent=1 // pred_check
      _
    $region31: #{svdsr_forward.1} parent=1 // pred_check_branch
      %33 = sbr.rel (0) target = $region33
    $region32: #{svdsr_forward.1} parent=1 // pred_region
      _
    $region33: #{svdsr_forward.1} parent=1 // pred_fallthru
      _
    // Predicated region
    $region34: #{svdsr_forward.1} parent=1 // pred_check
      _
    $region35: #{svdsr_forward.1} parent=1 // pred_check_branch
      %35 = sbr.rel (0) target = $region37
    $region36: #{svdsr_forward.1} parent=1 // pred_region
      _
    $region37: #{svdsr_forward.1} parent=1 // pred_fallthru
      _
    // Predicated region
    $region38: #{svdsr_forward.1} parent=1 // pred_check
      _
    $region39: #{svdsr_forward.1} parent=1 // pred_check_branch
      %37 = sbr.rel (0) target = $region41
    $region40: #{svdsr_forward.1} parent=1 // pred_region
      _
    $region41: #{svdsr_forward.1} parent=1 // pred_fallthru
      _
    // Predicated region
    $region42: #{svdsr_forward.1} parent=1 // pred_check
      _
    $region43: #{svdsr_forward.1} parent=1 // pred_check_branch
      %39 = sbr.rel (0) target = $region45
    $region44: #{svdsr_forward.1} parent=1 // pred_region
      _
    $region45: #{svdsr_forward.1} parent=1 // pred_fallthru
      _
    // Predicated region
    $region46: #{svdsr_forward.1} parent=1 // pred_check
      _
    $region47: #{svdsr_forward.1} parent=1 // pred_check_branch
      %41 = sbr.rel (0) target = $region49
    $region48: #{svdsr_forward.1} parent=1 // pred_region
      _
    $region49: #{svdsr_forward.1} parent=1 // pred_fallthru
      _
    %p42 = scmp.eq.s32.totalorder 0, 0
    // Predicated region
    $region50: #{svdsr_forward.1} parent=1 // pred_check
      %p43 = pneg %p42
    $region51: #{svdsr_forward.1} parent=1 // pred_check_branch
      %45 = sbr.rel (%p43) target = $region53
    $region52: #{svdsr_forward.1} parent=1 // pred_region
      %vm46 = vcmask 523264
      %47 = vst.msk [vmem:[#allocation2] sm:$0xff] %vm46, 0.0
      %48 = vst.msk [vmem:[#allocation2 + $0x8] sm:$0xff] %vm46, 0.0
      %49 = vst.msk [vmem:[#allocation2 + $0x10] sm:$0xff] %vm46, 0.0
      %50 = vst.msk [vmem:[#allocation2 + $0x18] sm:$0xff] %vm46, 0.0
      %51 = vst.msk [vmem:[#allocation2 + $0x20] sm:$0xff] %vm46, 0.0
      %52 = vst.msk [vmem:[#allocation2 + $0x28] sm:$0xff] %vm46, 0.0
      %53 = vst.msk [vmem:[#allocation2 + $0x30] sm:$0xff] %vm46, 0.0
      %54 = vst.msk [vmem:[#allocation2 + $0x38] sm:$0xff] %vm46, 0.0
      %vm55 = vcmask 0
      %56 = vst.msk [vmem:[#allocation3] sm:$0x1] %vm55, 0.0
      %57 = vst.msk [vmem:[#allocation4] sm:$0x1] %vm55, 0.0
      %58 = vst.msk [vmem:[#allocation5] sm:$0x1] %vm55, 0.0
      %59 = vst.msk [vmem:[#allocation6] sm:$0x1] %vm55, 0.0
    $region53: #{svdsr_forward.1} parent=1 // pred_fallthru
      _
    %v60 = vld [vmem:[%s0] sm:$0xff]
    %v61 = vld [vmem:[%s1] sm:$0xff]
    %v62 = vld [vmem:[%s1 + $0x8] sm:$0xff]
    %v63 = vld [vmem:[%s1 + $0x10] sm:$0xff]
    %v64 = vld [vmem:[%s1 + $0x18] sm:$0xff]
    %v65 = vld [vmem:[%s2] sm:$0x1]
    %v67 = vlaneseq
    %v68 = vshrl.u32 %v67, 7
    %v69 = vsub.s32 0, %v68
    %v70 = vrot.slane %v65, %v69
    %vm72 = vcmask 261120
    %v74 = vsel %vm72, %v60, 0
    %76 = vmatprep.subr.mxu0 0.0
    %77 = vmatpush1.msra.mxu0 %v61
    %78 = vmatprep.subr.mxu0 0.0
    %79 = vmatpush1.msra.mxu0 %v62
    %80 = vmatprep.subr.mxu0 0.0
    %81 = vmatpush1.msra.mxu0 %v63
    %82 = vmatprep.subr.mxu0 0.0
    %83 = vmatpush1.msra.mxu0 %v64
    %84 = vmatprep.subr.mxu0 0.0
    %85 = vmatpush1.msra.mxu0 0.0
    %86 = vmatprep.subr.mxu0 0.0
    %87 = vmatpush1.msra.mxu0 0.0
    %88 = vmatprep.subr.mxu0 0.0
    %89 = vmatpush1.msra.mxu0 0.0
    %90 = vmatprep.subr.mxu0 0.0
    %91 = vmatpush1.msra.mxu0 0.0
    %92 = vmatprep.subr.mxu0 0.0
    %93 = vmatpush1.msra.mxu0 0.0
    %94 = vmatprep.subr.mxu0 0.0
    %95 = vmatpush1.msra.mxu0 0.0
    %96 = vmatprep.subr.mxu0 0.0
    %97 = vmatpush1.msra.mxu0 0.0
    %98 = vmatprep.subr.mxu0 0.0
    %99 = vmatpush1.msra.mxu0 0.0
    %100 = vmatprep.subr.mxu0 0.0
    %101 = vmatpush1.msra.mxu0 0.0
    %102 = vmatprep.subr.mxu0 0.0
    %103 = vmatpush1.msra.mxu0 0.0
    %104 = vmatprep.subr.mxu0 0.0
    %105 = vmatpush1.msra.mxu0 0.0
    %106 = vmatprep.subr.mxu0 0.0
    %107 = vmatpush1.msra.mxu0 0.0
    %108 = vmatprep.subr.mxu0 0.0
    %109 = vmatpush1.msra.mxu0 0.0
    %110 = vmatprep.subr.mxu0 0.0
    %111 = vmatpush1.msra.mxu0 0.0
    %112 = vmatprep.subr.mxu0 0.0
    %113 = vmatpush1.msra.mxu0 0.0
    %114 = vmatprep.subr.mxu0 0.0
    %115 = vmatpush1.msra.mxu0 0.0
    %116 = vmatprep.subr.mxu0 0.0
    %117 = vmatpush1.msra.mxu0 0.0
    %118 = vmatprep.subr.mxu0 0.0
    %119 = vmatpush1.msra.mxu0 0.0
    %120 = vmatprep.subr.mxu0 0.0
    %121 = vmatpush1.msra.mxu0 0.0
    %122 = vmatprep.subr.mxu0 0.0
    %123 = vmatpush1.msra.mxu0 0.0
    %124 = vmatprep.subr.mxu0 0.0
    %125 = vmatpush1.msra.mxu0 0.0
    %126 = vmatprep.subr.mxu0 0.0
    %127 = vmatpush1.msra.mxu0 0.0
    %128 = vmatprep.subr.mxu0 0.0
    %129 = vmatpush1.msra.mxu0 0.0
    %130 = vmatprep.subr.mxu0 0.0
    %131 = vmatpush1.msra.mxu0 0.0
    %132 = vmatprep.subr.mxu0 0.0
    %133 = vmatpush1.msra.mxu0 0.0
    %134 = vmatprep.subr.mxu0 0.0
    %135 = vmatpush1.msra.mxu0 0.0
    %136 = vmatprep.subr.mxu0 0.0
    %137 = vmatpush1.msra.mxu0 0.0
    %138 = vmatprep.subr.mxu0 0.0
    %139 = vmatpush1.msra.mxu0 0.0
    %140 = vmatprep.mubr.f32.mxu0 0.0
    %141 = vmatmul.mubr.f32.gmra.mrb[0].mxu0 %v74
    %v142 = vpop.f32.mrb[0].mxu0
    %v143 = vadd.f32 %v70, %v142
    %v144 = vpop.f32.mrb[0].mxu0
    %145 = vdwg.mxu0
    %v146 = vld [vmem:[%s5] sm:$0xff]
    %v147 = vld [vmem:[%s5 + $0x8] sm:$0xff]
    %v148 = vld [vmem:[%s5 + $0x10] sm:$0xff]
    %v149 = vld [vmem:[%s5 + $0x18] sm:$0xff]
    %v150 = vld [vmem:[%s5 + $0x20] sm:$0xff]
    %v151 = vld [vmem:[%s5 + $0x28] sm:$0xff]
    %v152 = vld [vmem:[%s5 + $0x30] sm:$0xff]
    %v153 = vld [vmem:[%s5 + $0x38] sm:$0xff]
    %v154 = vld [vmem:[%s5 + $0x40] sm:$0xff]
    %v155 = vld [vmem:[%s5 + $0x48] sm:$0xff]
    %v156 = vld [vmem:[%s5 + $0x50] sm:$0xff]
    %v157 = vld [vmem:[%s5 + $0x58] sm:$0xff]
    %v158 = vld [vmem:[%s5 + $0x60] sm:$0xff]
    %v159 = vld [vmem:[%s5 + $0x68] sm:$0xff]
    %v160 = vld [vmem:[%s5 + $0x70] sm:$0xff]
    %v161 = vld [vmem:[%s5 + $0x78] sm:$0xff]
    %162 = vmatprep.subr.mxu0 0.0
    %163 = vmatpush1.msra.mxu0 %v146
    %164 = vmatprep.subr.mxu0 0.0
    %165 = vmatpush1.msra.mxu0 %v147
    %166 = vmatprep.subr.mxu0 0.0
    %167 = vmatpush1.msra.mxu0 %v148
    %168 = vmatprep.subr.mxu0 0.0
    %169 = vmatpush1.msra.mxu0 %v149
    %170 = vmatprep.subr.mxu0 0.0
    %171 = vmatpush1.msra.mxu0 %v150
    %172 = vmatprep.subr.mxu0 0.0
    %173 = vmatpush1.msra.mxu0 %v151
    %174 = vmatprep.subr.mxu0 0.0
    %175 = vmatpush1.msra.mxu0 %v152
    %176 = vmatprep.subr.mxu0 0.0
    %177 = vmatpush1.msra.mxu0 %v153
    %178 = vmatprep.subr.mxu0 0.0
    %179 = vmatpush1.msra.mxu0 %v154
    %180 = vmatprep.subr.mxu0 0.0
    %181 = vmatpush1.msra.mxu0 %v155
    %182 = vmatprep.subr.mxu0 0.0
    %183 = vmatpush1.msra.mxu0 %v156
    %184 = vmatprep.subr.mxu0 0.0
    %185 = vmatpush1.msra.mxu0 %v157
    %186 = vmatprep.subr.mxu0 0.0
    %187 = vmatpush1.msra.mxu0 %v158
    %188 = vmatprep.subr.mxu0 0.0
    %189 = vmatpush1.msra.mxu0 %v159
    %190 = vmatprep.subr.mxu0 0.0
    %191 = vmatpush1.msra.mxu0 %v160
    %192 = vmatprep.subr.mxu0 0.0
    %193 = vmatpush1.msra.mxu0 %v161
    %194 = vmatprep.subr.mxu0 0.0
    %195 = vmatpush1.msra.mxu0 0.0
    %196 = vmatprep.subr.mxu0 0.0
    %197 = vmatpush1.msra.mxu0 0.0
    %198 = vmatprep.subr.mxu0 0.0
    %199 = vmatpush1.msra.mxu0 0.0
    %200 = vmatprep.subr.mxu0 0.0
    %201 = vmatpush1.msra.mxu0 0.0
    %202 = vmatprep.subr.mxu0 0.0
    %203 = vmatpush1.msra.mxu0 0.0
    %204 = vmatprep.subr.mxu0 0.0
    %205 = vmatpush1.msra.mxu0 0.0
    %206 = vmatprep.subr.mxu0 0.0
    %207 = vmatpush1.msra.mxu0 0.0
    %208 = vmatprep.subr.mxu0 0.0
    %209 = vmatpush1.msra.mxu0 0.0
    %210 = vmatprep.subr.mxu0 0.0
    %211 = vmatpush1.msra.mxu0 0.0
    %212 = vmatprep.subr.mxu0 0.0
    %213 = vmatpush1.msra.mxu0 0.0
    %214 = vmatprep.subr.mxu0 0.0
    %215 = vmatpush1.msra.mxu0 0.0
    %216 = vmatprep.subr.mxu0 0.0
    %217 = vmatpush1.msra.mxu0 0.0
    %218 = vmatprep.subr.mxu0 0.0
    %219 = vmatpush1.msra.mxu0 0.0
    %220 = vmatprep.subr.mxu0 0.0
    %221 = vmatpush1.msra.mxu0 0.0
    %222 = vmatprep.subr.mxu0 0.0
    %223 = vmatpush1.msra.mxu0 0.0
    %224 = vmatprep.subr.mxu0 0.0
    %225 = vmatpush1.msra.mxu0 0.0
    %226 = vmatprep.mubr.f32.mxu0 0.0
    %227 = vmatmul.mubr.f32.gmra.mrb[0].mxu0 %v143
    %v228 = vpop.f32.mrb[0].mxu0
    %v229 = vadd.f32 0.0, %v228
    %v230 = vpop.f32.mrb[0].mxu0
    %231 = vdwg.mxu0
    %v232 = vsub.f32 %v143, %v229
    %v233 = vmul.f32 %v232, %v232
    %234 = vmatprep.subr.mxu0 0.0
    %235 = vmatpush1.msra.mxu0 %v146
    %236 = vmatprep.subr.mxu0 0.0
    %237 = vmatpush1.msra.mxu0 %v147
    %238 = vmatprep.subr.mxu0 0.0
    %239 = vmatpush1.msra.mxu0 %v148
    %240 = vmatprep.subr.mxu0 0.0
    %241 = vmatpush1.msra.mxu0 %v149
    %242 = vmatprep.subr.mxu0 0.0
    %243 = vmatpush1.msra.mxu0 %v150
    %244 = vmatprep.subr.mxu0 0.0
    %245 = vmatpush1.msra.mxu0 %v151
    %246 = vmatprep.subr.mxu0 0.0
    %247 = vmatpush1.msra.mxu0 %v152
    %248 = vmatprep.subr.mxu0 0.0
    %249 = vmatpush1.msra.mxu0 %v153
    %250 = vmatprep.subr.mxu0 0.0
    %251 = vmatpush1.msra.mxu0 %v154
    %252 = vmatprep.subr.mxu0 0.0
    %253 = vmatpush1.msra.mxu0 %v155
    %254 = vmatprep.subr.mxu0 0.0
    %255 = vmatpush1.msra.mxu0 %v156
    %256 = vmatprep.subr.mxu0 0.0
    %257 = vmatpush1.msra.mxu0 %v157
    %258 = vmatprep.subr.mxu0 0.0
    %259 = vmatpush1.msra.mxu0 %v158
    %260 = vmatprep.subr.mxu0 0.0
    %261 = vmatpush1.msra.mxu0 %v159
    %262 = vmatprep.subr.mxu0 0.0
    %263 = vmatpush1.msra.mxu0 %v160
    %264 = vmatprep.subr.mxu0 0.0
    %265 = vmatpush1.msra.mxu0 %v161
    %266 = vmatprep.subr.mxu0 0.0
    %267 = vmatpush1.msra.mxu0 0.0
    %268 = vmatprep.subr.mxu0 0.0
    %269 = vmatpush1.msra.mxu0 0.0
    %270 = vmatprep.subr.mxu0 0.0
    %271 = vmatpush1.msra.mxu0 0.0
    %272 = vmatprep.subr.mxu0 0.0
    %273 = vmatpush1.msra.mxu0 0.0
    %274 = vmatprep.subr.mxu0 0.0
    %275 = vmatpush1.msra.mxu0 0.0
    %276 = vmatprep.subr.mxu0 0.0
    %277 = vmatpush1.msra.mxu0 0.0
    %278 = vmatprep.subr.mxu0 0.0
    %279 = vmatpush1.msra.mxu0 0.0
    %280 = vmatprep.subr.mxu0 0.0
    %281 = vmatpush1.msra.mxu0 0.0
    %282 = vmatprep.subr.mxu0 0.0
    %283 = vmatpush1.msra.mxu0 0.0
    %284 = vmatprep.subr.mxu0 0.0
    %285 = vmatpush1.msra.mxu0 0.0
    %286 = vmatprep.subr.mxu0 0.0
    %287 = vmatpush1.msra.mxu0 0.0
    %288 = vmatprep.subr.mxu0 0.0
    %289 = vmatpush1.msra.mxu0 0.0
    %290 = vmatprep.subr.mxu0 0.0
    %291 = vmatpush1.msra.mxu0 0.0
    %292 = vmatprep.subr.mxu0 0.0
    %293 = vmatpush1.msra.mxu0 0.0
    %294 = vmatprep.subr.mxu0 0.0
    %295 = vmatpush1.msra.mxu0 0.0
    %296 = vmatprep.subr.mxu0 0.0
    %297 = vmatpush1.msra.mxu0 0.0
    %298 = vmatprep.mubr.f32.mxu0 0.0
    %299 = vmatmul.mubr.f32.gmra.mrb[0].mxu0 %v233
    %v300 = vpop.f32.mrb[0].mxu0
    %v301 = vadd.f32 1e-05, %v300
    %v302 = vpop.f32.mrb[0].mxu0
    %303 = vdwg.mxu0
    %v304 = vrsqrt.pop %v301
    %v305 = vmul.f32 %v232, %v304
    %v306 = vld [vmem:[%s3] sm:$0x1]
    %v308 = vlaneseq
    %v309 = vshrl.u32 %v308, 7
    %v310 = vsub.s32 0, %v309
    %v311 = vrot.slane %v306, %v310
    %v313 = vmul.f32 %v305, %v311
    %v314 = vld [vmem:[%s4] sm:$0x1]
    %v316 = vlaneseq
    %v317 = vshrl.u32 %v316, 7
    %v318 = vsub.s32 0, %v317
    %v319 = vrot.slane %v314, %v318
    %v321 = vadd.f32 %v313, %v319
    %v322 = vtanh.pop %v321
    %v323 = vld [vmem:[%s6] sm:$0xff]
    %v324 = vld [vmem:[%s6 + $0x8] sm:$0xff]
    %v325 = vld [vmem:[%s6 + $0x10] sm:$0xff]
    %v326 = vld [vmem:[%s6 + $0x18] sm:$0xff]
    %v327 = vld [vmem:[%s6 + $0x20] sm:$0xff]
    %v328 = vld [vmem:[%s6 + $0x28] sm:$0xff]
    %v329 = vld [vmem:[%s6 + $0x30] sm:$0xff]
    %v330 = vld [vmem:[%s6 + $0x38] sm:$0xff]
    %v331 = vld [vmem:[%s6 + $0x40] sm:$0xff]
    %v332 = vld [vmem:[%s6 + $0x48] sm:$0xff]
    %v333 = vld [vmem:[%s6 + $0x50] sm:$0xff]
    %v334 = vld [vmem:[%s6 + $0x58] sm:$0xff]
    %v335 = vld [vmem:[%s6 + $0x60] sm:$0xff]
    %v336 = vld [vmem:[%s6 + $0x68] sm:$0xff]
    %v337 = vld [vmem:[%s6 + $0x70] sm:$0xff]
    %v338 = vld [vmem:[%s6 + $0x78] sm:$0xff]
    %v339 = vld [vmem:[%s7] sm:$0x1]
    %v341 = vlaneseq
    %v342 = vshrl.u32 %v341, 7
    %v343 = vsub.s32 0, %v342
    %v344 = vrot.slane %v339, %v343
    %346 = vmatprep.subr.mxu0 0.0
    %347 = vmatpush1.msra.mxu0 %v323
    %348 = vmatprep.subr.mxu0 0.0
    %349 = vmatpush1.msra.mxu0 %v324
    %350 = vmatprep.subr.mxu0 0.0
    %351 = vmatpush1.msra.mxu0 %v325
    %352 = vmatprep.subr.mxu0 0.0
    %353 = vmatpush1.msra.mxu0 %v326
    %354 = vmatprep.subr.mxu0 0.0
    %355 = vmatpush1.msra.mxu0 %v327
    %356 = vmatprep.subr.mxu0 0.0
    %357 = vmatpush1.msra.mxu0 %v328
    %358 = vmatprep.subr.mxu0 0.0
    %359 = vmatpush1.msra.mxu0 %v329
    %360 = vmatprep.subr.mxu0 0.0
    %361 = vmatpush1.msra.mxu0 %v330
    %362 = vmatprep.subr.mxu0 0.0
    %363 = vmatpush1.msra.mxu0 %v331
    %364 = vmatprep.subr.mxu0 0.0
    %365 = vmatpush1.msra.mxu0 %v332
    %366 = vmatprep.subr.mxu0 0.0
    %367 = vmatpush1.msra.mxu0 %v333
    %368 = vmatprep.subr.mxu0 0.0
    %369 = vmatpush1.msra.mxu0 %v334
    %370 = vmatprep.subr.mxu0 0.0
    %371 = vmatpush1.msra.mxu0 %v335
    %372 = vmatprep.subr.mxu0 0.0
    %373 = vmatpush1.msra.mxu0 %v336
    %374 = vmatprep.subr.mxu0 0.0
    %375 = vmatpush1.msra.mxu0 %v337
    %376 = vmatprep.subr.mxu0 0.0
    %377 = vmatpush1.msra.mxu0 %v338
    %378 = vmatprep.subr.mxu0 0.0
    %379 = vmatpush1.msra.mxu0 0.0
    %380 = vmatprep.subr.mxu0 0.0
    %381 = vmatpush1.msra.mxu0 0.0
    %382 = vmatprep.subr.mxu0 0.0
    %383 = vmatpush1.msra.mxu0 0.0
    %384 = vmatprep.subr.mxu0 0.0
    %385 = vmatpush1.msra.mxu0 0.0
    %386 = vmatprep.subr.mxu0 0.0
    %387 = vmatpush1.msra.mxu0 0.0
    %388 = vmatprep.subr.mxu0 0.0
    %389 = vmatpush1.msra.mxu0 0.0
    %390 = vmatprep.subr.mxu0 0.0
    %391 = vmatpush1.msra.mxu0 0.0
    %392 = vmatprep.subr.mxu0 0.0
    %393 = vmatpush1.msra.mxu0 0.0
    %394 = vmatprep.subr.mxu0 0.0
    %395 = vmatpush1.msra.mxu0 0.0
    %396 = vmatprep.subr.mxu0 0.0
    %397 = vmatpush1.msra.mxu0 0.0
    %398 = vmatprep.subr.mxu0 0.0
    %399 = vmatpush1.msra.mxu0 0.0
    %400 = vmatprep.subr.mxu0 0.0
    %401 = vmatpush1.msra.mxu0 0.0
    %402 = vmatprep.subr.mxu0 0.0
    %403 = vmatpush1.msra.mxu0 0.0
    %404 = vmatprep.subr.mxu0 0.0
    %405 = vmatpush1.msra.mxu0 0.0
    %406 = vmatprep.subr.mxu0 0.0
    %407 = vmatpush1.msra.mxu0 0.0
    %408 = vmatprep.subr.mxu0 0.0
    %409 = vmatpush1.msra.mxu0 0.0
    %410 = vmatprep.mubr.f32.mxu0 0.0
    %411 = vmatmul.mubr.f32.gmra.mrb[0].mxu0 %v322
    %v412 = vpop.f32.mrb[0].mxu0
    %v413 = vadd.f32 %v344, %v412
    %v414 = vpop.f32.mrb[0].mxu0
    %415 = vdwg.mxu0
    %v416 = vmax.f32 %v413, 0.0
    %v417 = vld [vmem:[%s8] sm:$0xff]
    %v418 = vld [vmem:[%s8 + $0x8] sm:$0xff]
    %v419 = vld [vmem:[%s8 + $0x10] sm:$0xff]
    %v420 = vld [vmem:[%s8 + $0x18] sm:$0xff]
    %v421 = vld [vmem:[%s8 + $0x20] sm:$0xff]
    %v422 = vld [vmem:[%s8 + $0x28] sm:$0xff]
    %v423 = vld [vmem:[%s8 + $0x30] sm:$0xff]
    %v424 = vld [vmem:[%s8 + $0x38] sm:$0xff]
    %v425 = vld [vmem:[%s8 + $0x40] sm:$0xff]
    %v426 = vld [vmem:[%s8 + $0x48] sm:$0xff]
    %v427 = vld [vmem:[%s8 + $0x50] sm:$0xff]
    %v428 = vld [vmem:[%s8 + $0x58] sm:$0xff]
    %v429 = vld [vmem:[%s8 + $0x60] sm:$0xff]
    %v430 = vld [vmem:[%s8 + $0x68] sm:$0xff]
    %v431 = vld [vmem:[%s8 + $0x70] sm:$0xff]
    %v432 = vld [vmem:[%s8 + $0x78] sm:$0xff]
    %v433 = vld [vmem:[%s9] sm:$0x1]
    %v435 = vlaneseq
    %v436 = vshrl.u32 %v435, 7
    %v437 = vsub.s32 0, %v436
    %v438 = vrot.slane %v433, %v437
    %440 = vmatprep.subr.mxu0 0.0
    %441 = vmatpush1.msra.mxu0 %v417
    %442 = vmatprep.subr.mxu0 0.0
    %443 = vmatpush1.msra.mxu0 %v418
    %444 = vmatprep.subr.mxu0 0.0
    %445 = vmatpush1.msra.mxu0 %v419
    %446 = vmatprep.subr.mxu0 0.0
    %447 = vmatpush1.msra.mxu0 %v420
    %448 = vmatprep.subr.mxu0 0.0
    %449 = vmatpush1.msra.mxu0 %v421
    %450 = vmatprep.subr.mxu0 0.0
    %451 = vmatpush1.msra.mxu0 %v422
    %452 = vmatprep.subr.mxu0 0.0
    %453 = vmatpush1.msra.mxu0 %v423
    %454 = vmatprep.subr.mxu0 0.0
    %455 = vmatpush1.msra.mxu0 %v424
    %456 = vmatprep.subr.mxu0 0.0
    %457 = vmatpush1.msra.mxu0 %v425
    %458 = vmatprep.subr.mxu0 0.0
    %459 = vmatpush1.msra.mxu0 %v426
    %460 = vmatprep.subr.mxu0 0.0
    %461 = vmatpush1.msra.mxu0 %v427
    %462 = vmatprep.subr.mxu0 0.0
    %463 = vmatpush1.msra.mxu0 %v428
    %464 = vmatprep.subr.mxu0 0.0
    %465 = vmatpush1.msra.mxu0 %v429
    %466 = vmatprep.subr.mxu0 0.0
    %467 = vmatpush1.msra.mxu0 %v430
    %468 = vmatprep.subr.mxu0 0.0
    %469 = vmatpush1.msra.mxu0 %v431
    %470 = vmatprep.subr.mxu0 0.0
    %471 = vmatpush1.msra.mxu0 %v432
    %472 = vmatprep.subr.mxu0 0.0
    %473 = vmatpush1.msra.mxu0 0.0
    %474 = vmatprep.subr.mxu0 0.0
    %475 = vmatpush1.msra.mxu0 0.0
    %476 = vmatprep.subr.mxu0 0.0
    %477 = vmatpush1.msra.mxu0 0.0
    %478 = vmatprep.subr.mxu0 0.0
    %479 = vmatpush1.msra.mxu0 0.0
    %480 = vmatprep.subr.mxu0 0.0
    %481 = vmatpush1.msra.mxu0 0.0
    %482 = vmatprep.subr.mxu0 0.0
    %483 = vmatpush1.msra.mxu0 0.0
    %484 = vmatprep.subr.mxu0 0.0
    %485 = vmatpush1.msra.mxu0 0.0
    %486 = vmatprep.subr.mxu0 0.0
    %487 = vmatpush1.msra.mxu0 0.0
    %488 = vmatprep.subr.mxu0 0.0
    %489 = vmatpush1.msra.mxu0 0.0
    %490 = vmatprep.subr.mxu0 0.0
    %491 = vmatpush1.msra.mxu0 0.0
    %492 = vmatprep.subr.mxu0 0.0
    %493 = vmatpush1.msra.mxu0 0.0
    %494 = vmatprep.subr.mxu0 0.0
    %495 = vmatpush1.msra.mxu0 0.0
    %496 = vmatprep.subr.mxu0 0.0
    %497 = vmatpush1.msra.mxu0 0.0
    %498 = vmatprep.subr.mxu0 0.0
    %499 = vmatpush1.msra.mxu0 0.0
    %500 = vmatprep.subr.mxu0 0.0
    %501 = vmatpush1.msra.mxu0 0.0
    %502 = vmatprep.subr.mxu0 0.0
    %503 = vmatpush1.msra.mxu0 0.0
    %504 = vmatprep.mubr.f32.mxu0 0.0
    %505 = vmatmul.mubr.f32.gmra.mrb[0].mxu0 %v416
    %v506 = vpop.f32.mrb[0].mxu0
    %v507 = vadd.f32 %v438, %v506
    %v508 = vpop.f32.mrb[0].mxu0
    %509 = vdwg.mxu0
    %v510 = vmul.f32 %v507, %v507
    %v511 = vld [vmem:[%s10] sm:$0xff]
    %v512 = vld [vmem:[%s10 + $0x8] sm:$0xff]
    %v513 = vld [vmem:[%s10 + $0x10] sm:$0xff]
    %v514 = vld [vmem:[%s10 + $0x18] sm:$0xff]
    %v515 = vld [vmem:[%s10 + $0x20] sm:$0xff]
    %v516 = vld [vmem:[%s10 + $0x28] sm:$0xff]
    %v517 = vld [vmem:[%s10 + $0x30] sm:$0xff]
    %v518 = vld [vmem:[%s10 + $0x38] sm:$0xff]
    %v519 = vld [vmem:[%s11] sm:$0x1]
    %v521 = vlaneseq
    %v522 = vshrl.u32 %v521, 7
    %v523 = vsub.s32 0, %v522
    %v524 = vrot.slane %v519, %v523
    %vm526 = vcmask 523264
    %v528 = vsel %vm526, %v510, 0
    %530 = vmatprep.subr.mxu0 0.0
    %531 = vmatpush1.msra.mxu0 %v511
    %532 = vmatprep.subr.mxu0 0.0
    %533 = vmatpush1.msra.mxu0 %v512
    %534 = vmatprep.subr.mxu0 0.0
    %535 = vmatpush1.msra.mxu0 %v513
    %536 = vmatprep.subr.mxu0 0.0
    %537 = vmatpush1.msra.mxu0 %v514
    %538 = vmatprep.subr.mxu0 0.0
    %539 = vmatpush1.msra.mxu0 %v515
    %540 = vmatprep.subr.mxu0 0.0
    %541 = vmatpush1.msra.mxu0 %v516
    %542 = vmatprep.subr.mxu0 0.0
    %543 = vmatpush1.msra.mxu0 %v517
    %544 = vmatprep.subr.mxu0 0.0
    %545 = vmatpush1.msra.mxu0 %v518
    %546 = vmatprep.subr.mxu0 0.0
    %547 = vmatpush1.msra.mxu0 0.0
    %548 = vmatprep.subr.mxu0 0.0
    %549 = vmatpush1.msra.mxu0 0.0
    %550 = vmatprep.subr.mxu0 0.0
    %551 = vmatpush1.msra.mxu0 0.0
    %552 = vmatprep.subr.mxu0 0.0
    %553 = vmatpush1.msra.mxu0 0.0
    %554 = vmatprep.subr.mxu0 0.0
    %555 = vmatpush1.msra.mxu0 0.0
    %556 = vmatprep.subr.mxu0 0.0
    %557 = vmatpush1.msra.mxu0 0.0
    %558 = vmatprep.subr.mxu0 0.0
    %559 = vmatpush1.msra.mxu0 0.0
    %560 = vmatprep.subr.mxu0 0.0
    %561 = vmatpush1.msra.mxu0 0.0
    %562 = vmatprep.subr.mxu0 0.0
    %563 = vmatpush1.msra.mxu0 0.0
    %564 = vmatprep.subr.mxu0 0.0
    %565 = vmatpush1.msra.mxu0 0.0
    %566 = vmatprep.subr.mxu0 0.0
    %567 = vmatpush1.msra.mxu0 0.0
    %568 = vmatprep.subr.mxu0 0.0
    %569 = vmatpush1.msra.mxu0 0.0
    %570 = vmatprep.subr.mxu0 0.0
    %571 = vmatpush1.msra.mxu0 0.0
    %572 = vmatprep.subr.mxu0 0.0
    %573 = vmatpush1.msra.mxu0 0.0
    %574 = vmatprep.subr.mxu0 0.0
    %575 = vmatpush1.msra.mxu0 0.0
    %576 = vmatprep.subr.mxu0 0.0
    %577 = vmatpush1.msra.mxu0 0.0
    %578 = vmatprep.subr.mxu0 0.0
    %579 = vmatpush1.msra.mxu0 0.0
    %580 = vmatprep.subr.mxu0 0.0
    %581 = vmatpush1.msra.mxu0 0.0
    %582 = vmatprep.subr.mxu0 0.0
    %583 = vmatpush1.msra.mxu0 0.0
    %584 = vmatprep.subr.mxu0 0.0
    %585 = vmatpush1.msra.mxu0 0.0
    %586 = vmatprep.subr.mxu0 0.0
    %587 = vmatpush1.msra.mxu0 0.0
    %588 = vmatprep.subr.mxu0 0.0
    %589 = vmatpush1.msra.mxu0 0.0
    %590 = vmatprep.subr.mxu0 0.0
    %591 = vmatpush1.msra.mxu0 0.0
    %592 = vmatprep.subr.mxu0 0.0
    %593 = vmatpush1.msra.mxu0 0.0
    %594 = vmatprep.mubr.f32.mxu0 0.0
    %595 = vmatmul.mubr.f32.gmra.mrb[0].mxu0 %v528
    %v596 = vpop.f32.mrb[0].mxu0
    %v597 = vadd.f32 %v524, %v596
    %v598 = vpop.f32.mrb[0].mxu0
    %599 = vdwg.mxu0
    %v600 = vmax.f32 %v597, 1e-24
    %v601 = vrsqrt.pop %v600
    %v602 = vmul.f32 %v507, %v601
    %v603 = vld [vmem:[#allocation2] sm:$0xff]
    %v604 = vld [vmem:[#allocation2 + $0x8] sm:$0xff]
    %v605 = vld [vmem:[#allocation2 + $0x10] sm:$0xff]
    %v606 = vld [vmem:[#allocation2 + $0x18] sm:$0xff]
    %v607 = vld [vmem:[#allocation2 + $0x20] sm:$0xff]
    %v608 = vld [vmem:[#allocation2 + $0x28] sm:$0xff]
    %v609 = vld [vmem:[#allocation2 + $0x30] sm:$0xff]
    %v610 = vld [vmem:[#allocation2 + $0x38] sm:$0xff]
    %611 = vxpose.xlu0.b32.start [1/16] %v602, 128
    %612 = vxpose.xlu0.b32.cont [2/16] 0.0, 128
    %613 = vxpose.xlu0.b32.cont [3/16] 0.0, 128
    %614 = vxpose.xlu0.b32.cont [4/16] 0.0, 128
    %615 = vxpose.xlu0.b32.cont [5/16] 0.0, 128
    %616 = vxpose.xlu0.b32.cont [6/16] 0.0, 128
    %617 = vxpose.xlu0.b32.cont [7/16] 0.0, 128
    %618 = vxpose.xlu0.b32.cont [8/16] 0.0, 128
    %619 = vxpose.xlu0.b32.cont [9/16] 0.0, 128
    %620 = vxpose.xlu0.b32.cont [10/16] 0.0, 128
    %621 = vxpose.xlu0.b32.cont [11/16] 0.0, 128
    %622 = vxpose.xlu0.b32.cont [12/16] 0.0, 128
    %623 = vxpose.xlu0.b32.cont [13/16] 0.0, 128
    %624 = vxpose.xlu0.b32.cont [14/16] 0.0, 128
    %625 = vxpose.xlu0.b32.cont [15/16] 0.0, 128
    %626 = vxpose.xlu0.b32.end [16/16] 0.0, 128
    %v627 = vpop.trf.xlu0
    %v628 = vpop.trf.xlu0
    %v629 = vpop.trf.xlu0
    %v630 = vpop.trf.xlu0
    %v631 = vpop.trf.xlu0
    %v632 = vpop.trf.xlu0
    %v633 = vpop.trf.xlu0
    %v634 = vpop.trf.xlu0
    %v635 = vpop.trf.xlu0
    %v636 = vpop.trf.xlu0
    %v637 = vpop.trf.xlu0
    %v638 = vpop.trf.xlu0
    %v639 = vpop.trf.xlu0
    %v640 = vpop.trf.xlu0
    %v641 = vpop.trf.xlu0
    %v642 = vpop.trf.xlu0
    %vm643 = vcmask 64512
    %v645 = vsel %vm643, %v627, 0
    %v648 = vsel %vm643, %v628, 0
    %v651 = vsel %vm643, %v629, 0
    %v654 = vsel %vm643, %v630, 0
    %v657 = vsel %vm643, %v631, 0
    %v660 = vsel %vm643, %v632, 0
    %v663 = vsel %vm643, %v633, 0
    %v666 = vsel %vm643, %v634, 0
    %668 = vmatprep.subr.mxu0 0.0
    %669 = vmatpush1.msra.mxu0 %v602
    %670 = vmatprep.subr.mxu0 0.0
    %671 = vmatpush1.msra.mxu0 0.0
    %672 = vmatprep.subr.mxu0 0.0
    %673 = vmatpush1.msra.mxu0 0.0
    %674 = vmatprep.subr.mxu0 0.0
    %675 = vmatpush1.msra.mxu0 0.0
    %676 = vmatprep.subr.mxu0 0.0
    %677 = vmatpush1.msra.mxu0 0.0
    %678 = vmatprep.subr.mxu0 0.0
    %679 = vmatpush1.msra.mxu0 0.0
    %680 = vmatprep.subr.mxu0 0.0
    %681 = vmatpush1.msra.mxu0 0.0
    %682 = vmatprep.subr.mxu0 0.0
    %683 = vmatpush1.msra.mxu0 0.0
    %684 = vmatprep.subr.mxu0 0.0
    %685 = vmatpush1.msra.mxu0 0.0
    %686 = vmatprep.subr.mxu0 0.0
    %687 = vmatpush1.msra.mxu0 0.0
    %688 = vmatprep.subr.mxu0 0.0
    %689 = vmatpush1.msra.mxu0 0.0
    %690 = vmatprep.subr.mxu0 0.0
    %691 = vmatpush1.msra.mxu0 0.0
    %692 = vmatprep.subr.mxu0 0.0
    %693 = vmatpush1.msra.mxu0 0.0
    %694 = vmatprep.subr.mxu0 0.0
    %695 = vmatpush1.msra.mxu0 0.0
    %696 = vmatprep.subr.mxu0 0.0
    %697 = vmatpush1.msra.mxu0 0.0
    %698 = vmatprep.subr.mxu0 0.0
    %699 = vmatpush1.msra.mxu0 0.0
    %700 = vmatprep.subr.mxu0 0.0
    %701 = vmatpush1.msra.mxu0 0.0
    %702 = vmatprep.subr.mxu0 0.0
    %703 = vmatpush1.msra.mxu0 0.0
    %704 = vmatprep.subr.mxu0 0.0
    %705 = vmatpush1.msra.mxu0 0.0
    %706 = vmatprep.subr.mxu0 0.0
    %707 = vmatpush1.msra.mxu0 0.0
    %708 = vmatprep.subr.mxu0 0.0
    %709 = vmatpush1.msra.mxu0 0.0
    %710 = vmatprep.subr.mxu0 0.0
    %711 = vmatpush1.msra.mxu0 0.0
    %712 = vmatprep.subr.mxu0 0.0
    %713 = vmatpush1.msra.mxu0 0.0
    %714 = vmatprep.subr.mxu0 0.0
    %715 = vmatpush1.msra.mxu0 0.0
    %716 = vmatprep.subr.mxu0 0.0
    %717 = vmatpush1.msra.mxu0 0.0
    %718 = vmatprep.subr.mxu0 0.0
    %719 = vmatpush1.msra.mxu0 0.0
    %720 = vmatprep.subr.mxu0 0.0
    %721 = vmatpush1.msra.mxu0 0.0
    %722 = vmatprep.subr.mxu0 0.0
    %723 = vmatpush1.msra.mxu0 0.0
    %724 = vmatprep.subr.mxu0 0.0
    %725 = vmatpush1.msra.mxu0 0.0
    %726 = vmatprep.subr.mxu0 0.0
    %727 = vmatpush1.msra.mxu0 0.0
    %728 = vmatprep.subr.mxu0 0.0
    %729 = vmatpush1.msra.mxu0 0.0
    %730 = vmatprep.subr.mxu0 0.0
    %731 = vmatpush1.msra.mxu0 0.0
    %732 = vmatprep.mubr.f32.mxu0 0.0
    %733 = vmatmul.mubr.f32.gmra.mrb[0].mxu0 %v645
    %v734 = vpop.f32.mrb[0].mxu0
    %v735 = vadd.f32 0.0, %v734
    %v736 = vpop.f32.mrb[0].mxu0
    %737 = vmatprep.mubr.f32.mxu0 0.0
    %738 = vmatmul.mubr.f32.gmra.mrb[0].mxu0 %v648
    %v739 = vpop.f32.mrb[0].mxu0
    %v740 = vadd.f32 0.0, %v739
    %v741 = vpop.f32.mrb[0].mxu0
    %742 = vmatprep.mubr.f32.mxu0 0.0
    %743 = vmatmul.mubr.f32.gmra.mrb[0].mxu0 %v651
    %v744 = vpop.f32.mrb[0].mxu0
    %v745 = vadd.f32 0.0, %v744
    %v746 = vpop.f32.mrb[0].mxu0
    %747 = vmatprep.mubr.f32.mxu0 0.0
    %748 = vmatmul.mubr.f32.gmra.mrb[0].mxu0 %v654
    %v749 = vpop.f32.mrb[0].mxu0
    %v750 = vadd.f32 0.0, %v749
    %v751 = vpop.f32.mrb[0].mxu0
    %752 = vmatprep.mubr.f32.mxu0 0.0
    %753 = vmatmul.mubr.f32.gmra.mrb[0].mxu0 %v657
    %v754 = vpop.f32.mrb[0].mxu0
    %v755 = vadd.f32 0.0, %v754
    %v756 = vpop.f32.mrb[0].mxu0
    %757 = vmatprep.mubr.f32.mxu0 0.0
    %758 = vmatmul.mubr.f32.gmra.mrb[0].mxu0 %v660
    %v759 = vpop.f32.mrb[0].mxu0
    %v760 = vadd.f32 0.0, %v759
    %v761 = vpop.f32.mrb[0].mxu0
    %762 = vmatprep.mubr.f32.mxu0 0.0
    %763 = vmatmul.mubr.f32.gmra.mrb[0].mxu0 %v663
    %v764 = vpop.f32.mrb[0].mxu0
    %v765 = vadd.f32 0.0, %v764
    %v766 = vpop.f32.mrb[0].mxu0
    %767 = vmatprep.mubr.f32.mxu0 0.0
    %768 = vmatmul.mubr.f32.gmra.mrb[0].mxu0 %v666
    %v769 = vpop.f32.mrb[0].mxu0
    %v770 = vadd.f32 0.0, %v769
    %v771 = vpop.f32.mrb[0].mxu0
    %772 = vdwg.mxu0
    %v773 = vadd.f32 %v603, %v735
    %v774 = vadd.f32 %v604, %v740
    %v775 = vadd.f32 %v605, %v745
    %v776 = vadd.f32 %v606, %v750
    %v777 = vadd.f32 %v607, %v755
    %v778 = vadd.f32 %v608, %v760
    %v779 = vadd.f32 %v609, %v765
    %v780 = vadd.f32 %v610, %v770
    %781 = vst.msk [vmem:[#allocation2] sm:$0xff] %vm526, %v773
    %782 = vst.msk [vmem:[#allocation2 + $0x8] sm:$0xff] %vm526, %v774
    %783 = vst.msk [vmem:[#allocation2 + $0x10] sm:$0xff] %vm526, %v775
    %784 = vst.msk [vmem:[#allocation2 + $0x18] sm:$0xff] %vm526, %v776
    %785 = vst.msk [vmem:[#allocation2 + $0x20] sm:$0xff] %vm526, %v777
    %786 = vst.msk [vmem:[#allocation2 + $0x28] sm:$0xff] %vm526, %v778
    %787 = vst.msk [vmem:[#allocation2 + $0x30] sm:$0xff] %vm526, %v779
    %788 = vst.msk [vmem:[#allocation2 + $0x38] sm:$0xff] %vm526, %v780
    %790 = vrot.lane.b32.xlu0 %v602, 112
    %v791 = vpop.permute.xlu0 %790
    %v793 = vmul.f32 %v602, %v791
    %vm794 = vcmask 130048
    %v795 = vsel %vm794, %v793, 0.0
    %796 = vadd.xlane.f32.xlu0 %v795
    %v797 = vpop.xlane.xlu0 %796
    %799 = vrot.lane.b32.xlu0 %v793, 96
    %v800 = vpop.permute.xlu0 %799
    %v802 = vsel %vm794, %v800, 0.0
    %803 = vadd.xlane.f32.xlu0 %v802
    %v804 = vpop.xlane.xlu0 %803
    %v805 = vmul.f32 %v602, %v602
    %v806 = vsel %vm794, %v805, 0.0
    %807 = vadd.xlane.f32.xlu0 %v806
    %v808 = vpop.xlane.xlu0 %807
    %v809 = vmul.f32 %v804, 0.99
    %v810 = vsub.f32 %v797, %v809
    %v811 = vld [vmem:[#allocation3] sm:$0x1]
    %vm812 = vcmask 7168
    %v813 = vsel %vm812, %v797, 0.0
    %814 = vadd.xlane.f32.xlu0 %v813
    %v815 = vpop.xlane.xlu0 %814
    %v816 = vrot.slane %v815, 4
    %v817 = vadd.f32 %v815, %v816
    %v818 = vrot.slane %v817, 2
    %v819 = vadd.f32 %v817, %v818
    %v820 = vrot.slane %v819, 1
    %v821 = vadd.f32 %v819, %v820
    %s822 = vtos %v821
    %v823 = vstv %s822
    %v824 = vadd.f32 %v811, %v823
    %vm825 = vcmask 0
    %826 = vst.msk [vmem:[#allocation3] sm:$0x1] %vm825, %v824
    %v827 = vld [vmem:[#allocation4] sm:$0x1]
    %v828 = vmul.f32 %v810, %v810
    %v829 = vsel %vm812, %v828, 0.0
    %830 = vadd.xlane.f32.xlu0 %v829
    %v831 = vpop.xlane.xlu0 %830
    %v832 = vrot.slane %v831, 4
    %v833 = vadd.f32 %v831, %v832
    %v834 = vrot.slane %v833, 2
    %v835 = vadd.f32 %v833, %v834
    %v836 = vrot.slane %v835, 1
    %v837 = vadd.f32 %v835, %v836
    %s838 = vtos %v837
    %v839 = vstv %s838
    %v840 = vadd.f32 %v827, %v839
    %841 = vst.msk [vmem:[#allocation4] sm:$0x1] %vm825, %v840
    %v842 = vld [vmem:[#allocation5] sm:$0x1]
    %v843 = vsel %vm812, %v808, 0.0
    %844 = vadd.xlane.f32.xlu0 %v843
    %v845 = vpop.xlane.xlu0 %844
    %v846 = vrot.slane %v845, 4
    %v847 = vadd.f32 %v845, %v846
    %v848 = vrot.slane %v847, 2
    %v849 = vadd.f32 %v847, %v848
    %v850 = vrot.slane %v849, 1
    %v851 = vadd.f32 %v849, %v850
    %s852 = vtos %v851
    %v853 = vstv %s852
    %v854 = vadd.f32 %v842, %v853
    %855 = vst.msk [vmem:[#allocation5] sm:$0x1] %vm825, %v854
    %v856 = vld [vmem:[#allocation6] sm:$0x1]
    %v857 = vmul.f32 %v808, %v808
    %v858 = vsel %vm812, %v857, 0.0
    %859 = vadd.xlane.f32.xlu0 %v858
    %v860 = vpop.xlane.xlu0 %859
    %v861 = vrot.slane %v860, 4
    %v862 = vadd.f32 %v860, %v861
    %v863 = vrot.slane %v862, 2
    %v864 = vadd.f32 %v862, %v863
    %v865 = vrot.slane %v864, 1
    %v866 = vadd.f32 %v864, %v865
    %s867 = vtos %v866
    %v868 = vstv %s867
    %v869 = vadd.f32 %v856, %v868
    %870 = vst.msk [vmem:[#allocation6] sm:$0x1] %vm825, %v869
    // Predicated region
    $region54: #{svdsr_forward.1} parent=1 // pred_check
      %p871 = pneg %p42
    $region55: #{svdsr_forward.1} parent=1 // pred_check_branch
      %873 = sbr.rel (%p871) target = $region57
    $region56: #{svdsr_forward.1} parent=1 // pred_region
      %v874 = vld [vmem:[#allocation2] sm:$0xff]
      %v875 = vld [vmem:[#allocation2 + $0x8] sm:$0xff]
      %v876 = vld [vmem:[#allocation2 + $0x10] sm:$0xff]
      %v877 = vld [vmem:[#allocation2 + $0x18] sm:$0xff]
      %v878 = vld [vmem:[#allocation2 + $0x20] sm:$0xff]
      %v879 = vld [vmem:[#allocation2 + $0x28] sm:$0xff]
      %v880 = vld [vmem:[#allocation2 + $0x30] sm:$0xff]
      %v881 = vld [vmem:[#allocation2 + $0x38] sm:$0xff]
      %884 = vrot.lane.b32.xlu0 %v876, 112
      %v885 = vpop.permute.xlu0 %884
      %886 = vrot.lane.b32.xlu0 %v877, 112
      %v887 = vpop.permute.xlu0 %886
      %v890 = vmul.f32 %v874, %v885
      %v891 = vmul.f32 %v875, %v887
      %v892 = vsel %vm794, %v890, 0.0
      %v893 = vsel %vm794, %v891, 0.0
      %v894 = vadd.f32 %v892, %v893
      %895 = vadd.xlane.f32.xlu0 %v894
      %v896 = vpop.xlane.xlu0 %895
      %v897 = vrot.slane %v896, 4
      %v898 = vadd.f32 %v896, %v897
      %v899 = vrot.slane %v898, 2
      %v900 = vadd.f32 %v898, %v899
      %v901 = vrot.slane %v900, 1
      %v902 = vadd.f32 %v900, %v901
      %s903 = vtos %v902
      %v904 = vstv %s903
      %907 = vrot.lane.b32.xlu0 %v890, 96
      %v908 = vpop.permute.xlu0 %907
      %909 = vrot.lane.b32.xlu0 %v891, 96
      %v910 = vpop.permute.xlu0 %909
      %v913 = vsel %vm794, %v908, 0.0
      %v914 = vsel %vm794, %v910, 0.0
      %v915 = vadd.f32 %v913, %v914
      %916 = vadd.xlane.f32.xlu0 %v915
      %v917 = vpop.xlane.xlu0 %916
      %v918 = vrot.slane %v917, 4
      %v919 = vadd.f32 %v917, %v918
      %v920 = vrot.slane %v919, 2
      %v921 = vadd.f32 %v919, %v920
      %v922 = vrot.slane %v921, 1
      %v923 = vadd.f32 %v921, %v922
      %s924 = vtos %v923
      %v925 = vstv %s924
      %v926 = vmul.f32 %v925, 1.98
      %v927 = vsub.f32 %v904, %v926
      %930 = vrot.lane.b32.xlu0 %v880, 112
      %v931 = vpop.permute.xlu0 %930
      %932 = vrot.lane.b32.xlu0 %v881, 112
      %v933 = vpop.permute.xlu0 %932
      %v936 = vmul.f32 %v878, %v931
      %v937 = vmul.f32 %v879, %v933
      %940 = vrot.lane.b32.xlu0 %v936, 96
      %v941 = vpop.permute.xlu0 %940
      %942 = vrot.lane.b32.xlu0 %v937, 96
      %v943 = vpop.permute.xlu0 %942
      %v946 = vsel %vm794, %v941, 0.0
      %v947 = vsel %vm794, %v943, 0.0
      %v948 = vadd.f32 %v946, %v947
      %949 = vadd.xlane.f32.xlu0 %v948
      %v950 = vpop.xlane.xlu0 %949
      %v951 = vrot.slane %v950, 4
      %v952 = vadd.f32 %v950, %v951
      %v953 = vrot.slane %v952, 2
      %v954 = vadd.f32 %v952, %v953
      %v955 = vrot.slane %v954, 1
      %v956 = vadd.f32 %v954, %v955
      %s957 = vtos %v956
      %v958 = vstv %s957
      %v959 = vmul.f32 %v958, 0.9801
      %v960 = vadd.f32 %v927, %v959
      %v961 = vmul.f32 %v874, %v874
      %v962 = vmul.f32 %v875, %v875
      %v963 = vsel %vm794, %v961, 0.0
      %v964 = vsel %vm794, %v962, 0.0
      %v965 = vadd.f32 %v963, %v964
      %966 = vadd.xlane.f32.xlu0 %v965
      %v967 = vpop.xlane.xlu0 %966
      %v968 = vrot.slane %v967, 4
      %v969 = vadd.f32 %v967, %v968
      %v970 = vrot.slane %v969, 2
      %v971 = vadd.f32 %v969, %v970
      %v972 = vrot.slane %v971, 1
      %v973 = vadd.f32 %v971, %v972
      %s974 = vtos %v973
      %v975 = vstv %s974
      %v976 = vld [vmem:[#allocation3] sm:$0x1]
      %v977 = vmul.f32 %v976, -2.0
      %v978 = vmul.f32 %v977, 0.125
      %v979 = vld [vmem:[#allocation4] sm:$0x1]
      %v980 = vsub.f32 %v960, %v979
      %v981 = vmul.f32 %v980, 0.017857144
      %v982 = vadd.f32 %v978, %v981
      %v983 = vld [vmem:[#allocation6] sm:$0x1]
      %v984 = vsub.f32 %v975, %v983
      %v985 = vmul.f32 %v984, 0.017857144
      %v986 = vadd.f32 %v982, %v985
      %v987 = vld [vmem:[#allocation5] sm:$0x1]
      %v988 = vmul.f32 %v987, 2.0
      %v989 = vmul.f32 %v988, 0.125
      %v990 = vsub.f32 %v986, %v989
      %991 = vst.msk [vmem:[#allocation7] sm:$0x1] %vm825, %v990
    $region57: #{svdsr_forward.1} parent=1 // pred_fallthru
      _
    // Predicated region
    $region58: #{svdsr_forward.1} parent=1 // pred_check
      _
    $region59: #{svdsr_forward.1} parent=1 // pred_check_branch
      %993 = sbr.rel (0) target = $region61
    $region60: #{svdsr_forward.1} parent=1 // pred_region
      %s995 = ssub.s32 16, 16
      %996 = vsyncadd [#allocation8], %s995
      %s998 = sshll.u32 [#allocation7], 4
      %s999 = int_to_ptr.vmem [resolvable:$true] %s998
      %1001 = dma.vmem_to_hbm [thread:$0]  %s999, 16, %s12, [#allocation8]
    $region61: #{svdsr_forward.1} parent=1 // pred_fallthru
      _
    // Predicated region
    $region62: #{svdsr_forward.1} parent=1 // pred_check
      _
    $region63: #{svdsr_forward.1} parent=1 // pred_check_branch
      %1003 = sbr.rel (0) target = $region65
    $region64: #{svdsr_forward.1} parent=1 // pred_region
      %1004 = dma.done [#allocation8], 16
    $region65: #{svdsr_forward.1} parent=1 // pred_fallthru
      _
    %1005 = vsyncpa [#allocation8], 1

</llo_original>
